<compile_context>
chip_gen: v7x
topology: tpu7x:2x2x1
jax: 0.10.0
libtpu: 0.0.40
codegen_flags: <defaults>
</compile_context>

<pallas_src>
import jax
import jax.numpy as jnp
from jax.experimental import pallas as pl
from jax.experimental.pallas import tpu as pltpu

# ---------------- synthetic BERT config ----------------
VOCAB = 100
HID = 32
N_LAYERS = 2
N_HEADS = 4
HEAD = HID // N_HEADS
FFN = 64
MAX_POS = 32
TYPE_VOCAB = 2
NUM_ACTIONS = 8
LN_EPS = 1e-12
NEG_INF = -1e9


# ---------------- in-kernel helpers ----------------
def _ln(x, g, b):
    mu = jnp.mean(x, axis=-1, keepdims=True)
    var = jnp.mean((x - mu) ** 2, axis=-1, keepdims=True)
    return (x - mu) * jax.lax.rsqrt(var + LN_EPS) * g + b


def _gelu(x):
    # TODO(synk): HF BERT uses exact erf-GELU; tanh approximation kept for a
    # Mosaic-safe lowering (difference is ~1e-3 at these magnitudes).
    return 0.5 * x * (1.0 + jnp.tanh(0.7978845608028654 * (x + 0.044715 * x * x * x)))


# ---------------- fused forward kernel ----------------
def _make_fused_kernel(B, T):
    N = B * T
    bf16 = jnp.bfloat16
    f32 = jnp.float32
    scale = 1.0 / (HEAD ** 0.5)

    def kernel(x_emb_ref, mask_ref, emb_ln_ref,
               wqkv_ref, wo_ref, w1_ref, w2_ref, vecs_ref,
               pool_w_ref, pool_b_ref, act_w_ref, act_b_ref, onehot_ref,
               logits_ref, loss_ref, x_scr):
        l = pl.program_id(0)

        # ---- embedding LayerNorm (first grid step only) ----
        @pl.when(l == 0)
        def _():
            e = emb_ln_ref[...]
            x_scr[...] = _ln(x_emb_ref[...], e[0:1, :], e[1:2, :])

        x = x_scr[...]                                        # [N, HID] f32

        # ---- unpack this layer's packed bias / LayerNorm vectors ----
        vecs = vecs_ref[...]                                  # [4, 3*HID] f32
        bqkv = vecs[0:1, :]                                   # [1, 3*HID]
        bo = vecs[1:2, 0:HID]
        ln1g = vecs[1:2, HID:2 * HID]
        ln1b = vecs[1:2, 2 * HID:3 * HID]
        b1 = vecs[2:3, 0:FFN]
        b2 = vecs[3:4, 0:HID]
        ln2g = vecs[3:4, HID:2 * HID]
        ln2b = vecs[3:4, 2 * HID:3 * HID]

        # ---- fused QKV projection: one MXU op (bf16 in, f32 accumulate) ----
        qkv = jnp.dot(x.astype(bf16), wqkv_ref[...],
                      preferred_element_type=f32) + bqkv      # [N, 3*HID] f32

        # head-major stacks [NH, N, HEAD] (leading-dim stack; tiled dims untouched)
        qs = jnp.stack([qkv[:, h * HEAD:(h + 1) * HEAD]
                        for h in range(N_HEADS)], axis=0)
        ks = jnp.stack([qkv[:, HID + h * HEAD:HID + (h + 1) * HEAD]
                        for h in range(N_HEADS)], axis=0)
        vs = jnp.stack([qkv[:, 2 * HID + h * HEAD:2 * HID + (h + 1) * HEAD]
                        for h in range(N_HEADS)], axis=0)

        # ---- per-example, head-batched attention ----
        mask = mask_ref[...]                                  # [B, T] f32 (1 keep / 0 pad)
        # TODO(synk): at real shapes move this static unroll over B onto a
        # "parallel" grid axis so v7x can shard examples across its 2 TensorCores.
        ctx_rows = []
        for b in range(B):
            r = b * T
            qb = qs[:, r:r + T, :].astype(bf16)               # [NH, T, HEAD]
            kb = ks[:, r:r + T, :].astype(bf16)
            vb = vs[:, r:r + T, :].astype(bf16)
            bias = jnp.where(mask[b:b + 1, :] > 0.5, 0.0, NEG_INF)   # [1, T] f32
            s = jnp.einsum('hqd,hkd->hqk', qb, kb,
                           preferred_element_type=f32) * scale + bias  # [NH, T, T] f32
            m = jnp.max(s, axis=-1, keepdims=True)
            p = jnp.exp(s - m)
            p = p * pl.reciprocal(jnp.sum(p, axis=-1, keepdims=True), approx=True)
            ctx_b = jnp.einsum('hqk,hkd->hqd', p.astype(bf16), vb,
                               preferred_element_type=f32)    # [NH, T, HEAD] f32
            ctx_rows.append(jnp.concatenate([ctx_b[h] for h in range(N_HEADS)],
                                            axis=-1))         # [T, HID]
        ctx = jnp.concatenate(ctx_rows, axis=0)               # [N, HID] f32

        # ---- output projection + residual + LN1 (single [N,HID]x[HID,HID] matmul) ----
        attn = jnp.dot(ctx.astype(bf16), wo_ref[...], preferred_element_type=f32) + bo
        y = _ln(x + attn, ln1g, ln1b)

        # ---- FFN (gelu) + residual + LN2 ----
        h1 = _gelu(jnp.dot(y.astype(bf16), w1_ref[...], preferred_element_type=f32) + b1)
        h2 = jnp.dot(h1.astype(bf16), w2_ref[...], preferred_element_type=f32) + b2
        x_new = _ln(y + h2, ln2g, ln2b)
        x_scr[...] = x_new                                    # stays in VMEM across layers

        # ---- pooler + classifier + CrossEntropyLoss (last grid step only) ----
        @pl.when(l == pl.num_programs(0) - 1)
        def _():
            cls = jnp.concatenate([x_new[b * T:b * T + 1, :] for b in range(B)],
                                  axis=0)                     # [B, HID] (CLS rows)
            pooled = jnp.tanh(jnp.dot(cls.astype(bf16), pool_w_ref[...],
                                      preferred_element_type=f32) + pool_b_ref[...])
            # dropout = identity (eval mode)
            logits = jnp.dot(pooled.astype(bf16), act_w_ref[...],
                             preferred_element_type=f32) + act_b_ref[...]
            logits_ref[...] = logits
            mx = jnp.max(logits, axis=-1, keepdims=True)
            lse = mx + jnp.log(jnp.sum(jnp.exp(logits - mx), axis=-1, keepdims=True))
            nll = lse - jnp.sum(onehot_ref[...] * logits, axis=-1, keepdims=True)  # [B,1]
            loss_ref[...] = jnp.sum(nll, axis=0, keepdims=True) * (1.0 / B)

    return kernel


# ---------------- parameter packing / wrapper ----------------
def _pack_layer_vecs(lp):
    pad = jnp.zeros((3 * HID - FFN,), jnp.float32)
    return jnp.stack([
        lp["bqkv"],
        jnp.concatenate([lp["bo"], lp["ln1_g"], lp["ln1_b"]]),
        jnp.concatenate([lp["b1"], pad]),
        jnp.concatenate([lp["b2"], lp["ln2_g"], lp["ln2_b"]]),
    ], axis=0)                                                # [4, 3*HID]


def action_bert_forward(params, input_ids, attention_mask, token_type_ids, action_label):
    B, T = input_ids.shape
    N = B * T
    bf16 = jnp.bfloat16

    # --- embeddings: table gathers stay in XLA glue ---
    we = params["word_emb"][input_ids]                        # [B, T, H]
    pe = params["pos_emb"][:T][None, :, :]                    # [1, T, H]
    te = params["type_emb"][token_type_ids]                   # [B, T, H]
    x_emb = (we + pe + te).reshape(N, HID).astype(jnp.float32)

    mask = attention_mask.astype(jnp.float32)                 # [B, T]
    emb_ln = jnp.stack([params["emb_ln_g"], params["emb_ln_b"]], axis=0)   # [2, HID]
    onehot = jax.nn.one_hot(action_label, NUM_ACTIONS, dtype=jnp.float32)  # [B, A]

    layers = params["layers"]
    wqkv = jnp.stack([lp["wqkv"] for lp in layers]).astype(bf16)   # [L, HID, 3*HID]
    wo = jnp.stack([lp["wo"] for lp in layers]).astype(bf16)       # [L, HID, HID]
    w1 = jnp.stack([lp["w1"] for lp in layers]).astype(bf16)       # [L, HID, FFN]
    w2 = jnp.stack([lp["w2"] for lp in layers]).astype(bf16)       # [L, FFN, HID]
    vecs = jnp.stack([_pack_layer_vecs(lp) for lp in layers])      # [L, 4, 3*HID] f32

    grid_spec = pltpu.PrefetchScalarGridSpec(
        num_scalar_prefetch=0,
        grid=(N_LAYERS,),
        in_specs=[
            pl.BlockSpec((N, HID), lambda l: (0, 0)),                  # x_emb
            pl.BlockSpec((B, T), lambda l: (0, 0)),                    # key-padding mask
            pl.BlockSpec((2, HID), lambda l: (0, 0)),                  # emb LN gamma/beta
            pl.BlockSpec((None, HID, 3 * HID), lambda l: (l, 0, 0)),   # wqkv (per layer)
            pl.BlockSpec((None, HID, HID), lambda l: (l, 0, 0)),       # wo
            pl.BlockSpec((None, HID, FFN), lambda l: (l, 0, 0)),       # w1
            pl.BlockSpec((None, FFN, HID), lambda l: (l, 0, 0)),       # w2
            pl.BlockSpec((None, 4, 3 * HID), lambda l: (l, 0, 0)),     # packed bias/LN vecs
            pl.BlockSpec((HID, HID), lambda l: (0, 0)),                # pool_w
            pl.BlockSpec((1, HID), lambda l: (0, 0)),                  # pool_b
            pl.BlockSpec((HID, NUM_ACTIONS), lambda l: (0, 0)),        # act_w
            pl.BlockSpec((1, NUM_ACTIONS), lambda l: (0, 0)),          # act_b
            pl.BlockSpec((B, NUM_ACTIONS), lambda l: (0, 0)),          # one-hot labels
        ],
        out_specs=(
            pl.BlockSpec((B, NUM_ACTIONS), lambda l: (0, 0)),          # action logits
            pl.BlockSpec((1, 1), lambda l: (0, 0)),                    # mean CE loss
        ),
        scratch_shapes=[pltpu.VMEM((N, HID), jnp.float32)],            # resident activation
    )

    logits, loss = pl.pallas_call(
        _make_fused_kernel(B, T),
        out_shape=(jax.ShapeDtypeStruct((B, NUM_ACTIONS), jnp.float32),
                   jax.ShapeDtypeStruct((1, 1), jnp.float32)),
        grid_spec=grid_spec,
        compiler_params=pltpu.CompilerParams(dimension_semantics=("arbitrary",)),
    )(x_emb, mask, emb_ln, wqkv, wo, w1, w2, vecs,
      params["pool_w"].astype(bf16), params["pool_b"].reshape(1, HID),
      params["act_w"].astype(bf16), params["act_b"].reshape(1, NUM_ACTIONS),
      onehot)

    return logits, loss[0, 0]


# ---------------- deterministic parameter init ----------------
def init_params(key):
    keys = iter(jax.random.split(key, 64))

    def nrm(shape, scale=0.02):
        return scale * jax.random.normal(next(keys), shape, dtype=jnp.float32)

    params = {
        "word_emb": nrm((VOCAB, HID)),
        "pos_emb": nrm((MAX_POS, HID)),
        "type_emb": nrm((TYPE_VOCAB, HID)),
        "emb_ln_g": jnp.ones((HID,), jnp.float32),
        "emb_ln_b": jnp.zeros((HID,), jnp.float32),
        "layers": [],
        "pool_w": nrm((HID, HID)),
        "pool_b": jnp.zeros((HID,), jnp.float32),
        "act_w": nrm((HID, NUM_ACTIONS)),
        "act_b": jnp.zeros((NUM_ACTIONS,), jnp.float32),
    }
    for _ in range(N_LAYERS):
        params["layers"].append({
            "wqkv": nrm((HID, 3 * HID)), "bqkv": jnp.zeros((3 * HID,), jnp.float32),
            "wo": nrm((HID, HID)), "bo": jnp.zeros((HID,), jnp.float32),
            "ln1_g": jnp.ones((HID,), jnp.float32), "ln1_b": jnp.zeros((HID,), jnp.float32),
            "w1": nrm((HID, FFN)), "b1": jnp.zeros((FFN,), jnp.float32),
            "w2": nrm((FFN, HID)), "b2": jnp.zeros((HID,), jnp.float32),
            "ln2_g": jnp.ones((HID,), jnp.float32), "ln2_b": jnp.zeros((HID,), jnp.float32),
        })
    return params


if __name__ == "__main__":
    key = jax.random.PRNGKey(0)
    kp, kd = jax.random.split(key)
    params = init_params(kp)

    B, T = 2, 8
    ks = jax.random.split(kd, 4)
    input_ids = jax.random.randint(ks[0], (B, T), 0, VOCAB)
    attention_mask = jnp.ones((B, T), jnp.int32)
    token_type_ids = jnp.zeros((B, T), jnp.int32)
    action_label = jax.random.randint(ks[1], (B,), 0, NUM_ACTIONS)

    forward = jax.jit(action_bert_forward)
    action_logits, loss = forward(params, input_ids, attention_mask,
                                  token_type_ids, action_label)
    jax.block_until_ready((action_logits, loss))

    assert action_logits.shape == (B, NUM_ACTIONS)
    assert loss.shape == ()
    assert bool(jnp.isfinite(loss))
    print("KERNEL_OK")
</pallas_src>

<mosaic_0001>
module attributes {stable_mosaic.version = 11 : i64} {
  func.func @kernel(%arg0: i32, %arg1: memref<16x32xf32, #tpu.memory_space<vmem>>, %arg2: memref<2x8xf32, #tpu.memory_space<vmem>>, %arg3: memref<2x32xf32, #tpu.memory_space<vmem>>, %arg4: memref<1x32x96xbf16, #tpu.memory_space<vmem>>, %arg5: memref<1x32x32xbf16, #tpu.memory_space<vmem>>, %arg6: memref<1x32x64xbf16, #tpu.memory_space<vmem>>, %arg7: memref<1x64x32xbf16, #tpu.memory_space<vmem>>, %arg8: memref<1x4x96xf32, #tpu.memory_space<vmem>>, %arg9: memref<32x32xbf16, #tpu.memory_space<vmem>>, %arg10: memref<1x32xf32, #tpu.memory_space<vmem>>, %arg11: memref<32x8xbf16, #tpu.memory_space<vmem>>, %arg12: memref<1x8xf32, #tpu.memory_space<vmem>>, %arg13: memref<2x8xf32, #tpu.memory_space<vmem>>, %arg14: memref<2x8xf32, #tpu.memory_space<vmem>>, %arg15: memref<1x1xf32, #tpu.memory_space<vmem>>, %arg16: memref<16x32xf32, #tpu.memory_space<vmem>>) attributes {dimension_semantics = [#tpu.dimension_semantics<arbitrary>], iteration_bounds = array<i64: 2>, scalar_prefetch = 0 : i64, scratch_operands = 1 : i64, tpu.core_type = #tpu.core_type<tc>, window_params = [{pipeline_mode = #tpu.pipeline_mode<synchronous>, transform_indices = @transform_0, window_bounds = array<i64: 16, 32>}, {pipeline_mode = #tpu.pipeline_mode<synchronous>, transform_indices = @transform_1, window_bounds = array<i64: 2, 8>}, {pipeline_mode = #tpu.pipeline_mode<synchronous>, transform_indices = @transform_2, window_bounds = array<i64: 2, 32>}, {transform_indices = @transform_3, window_bounds = array<i64: 1, 32, 96>}, {transform_indices = @transform_4, window_bounds = array<i64: 1, 32, 32>}, {transform_indices = @transform_5, window_bounds = array<i64: 1, 32, 64>}, {transform_indices = @transform_6, window_bounds = array<i64: 1, 64, 32>}, {transform_indices = @transform_7, window_bounds = array<i64: 1, 4, 96>}, {pipeline_mode = #tpu.pipeline_mode<synchronous>, transform_indices = @transform_8, window_bounds = array<i64: 32, 32>}, {pipeline_mode = #tpu.pipeline_mode<synchronous>, transform_indices = @transform_9, window_bounds = array<i64: 1, 32>}, {pipeline_mode = #tpu.pipeline_mode<synchronous>, transform_indices = @transform_10, window_bounds = array<i64: 32, 8>}, {pipeline_mode = #tpu.pipeline_mode<synchronous>, transform_indices = @transform_11, window_bounds = array<i64: 1, 8>}, {pipeline_mode = #tpu.pipeline_mode<synchronous>, transform_indices = @transform_12, window_bounds = array<i64: 2, 8>}, {pipeline_mode = #tpu.pipeline_mode<synchronous>, transform_indices = @transform_13, window_bounds = array<i64: 2, 8>}, {pipeline_mode = #tpu.pipeline_mode<synchronous>, transform_indices = @transform_14, window_bounds = array<i64: 1, 1>}]} {
    %c0_i32 = arith.constant 0 : i32
    %0 = arith.cmpi eq, %arg0, %c0_i32 : i32
    %1 = arith.extui %0 : i1 to i32
    %c0_i32_0 = arith.constant 0 : i32
    %2 = arith.cmpi ne, %1, %c0_i32_0 : i32
    scf.if %2 {
      %c0_55 = arith.constant 0 : index
      %c0_56 = arith.constant 0 : index
      %208 = vector.load %arg3[%c0_55, %c0_56] : memref<2x32xf32, #tpu.memory_space<vmem>>, vector<2x32xf32>
      %c0_57 = arith.constant 0 : index
      %c0_58 = arith.constant 0 : index
      %209 = vector.load %arg1[%c0_57, %c0_58] : memref<16x32xf32, #tpu.memory_space<vmem>>, vector<16x32xf32>
      %210 = vector.extract_strided_slice %208 {offsets = [0, 0], sizes = [1, 32], strides = [1, 1]} : vector<2x32xf32> to vector<1x32xf32>
      %211 = vector.extract_strided_slice %208 {offsets = [1, 0], sizes = [1, 32], strides = [1, 1]} : vector<2x32xf32> to vector<1x32xf32>
      %cst_59 = arith.constant dense<0.000000e+00> : vector<16xf32>
      %212 = vector.multi_reduction <add>, %209, %cst_59 [1] : vector<16x32xf32> to vector<16xf32>
      %213 = vector.shape_cast %212 : vector<16xf32> to vector<16x1xf32>
      %cst_60 = arith.constant 3.200000e+01 : f32
      %214 = vector.broadcast %cst_60 : f32 to vector<16x1xf32>
      %215 = arith.divf %213, %214 : vector<16x1xf32>
      %216 = vector.broadcast %215 : vector<16x1xf32> to vector<16x32xf32>
      %217 = arith.subf %209, %216 : vector<16x32xf32>
      %218 = arith.mulf %217, %217 : vector<16x32xf32>
      %cst_61 = arith.constant dense<0.000000e+00> : vector<16xf32>
      %219 = vector.multi_reduction <add>, %218, %cst_61 [1] : vector<16x32xf32> to vector<16xf32>
      %220 = vector.shape_cast %219 : vector<16xf32> to vector<16x1xf32>
      %cst_62 = arith.constant 3.200000e+01 : f32
      %221 = vector.broadcast %cst_62 : f32 to vector<16x1xf32>
      %222 = arith.divf %220, %221 : vector<16x1xf32>
      %223 = vector.broadcast %215 : vector<16x1xf32> to vector<16x32xf32>
      %224 = arith.subf %209, %223 : vector<16x32xf32>
      %cst_63 = arith.constant 9.99999996E-13 : f32
      %225 = vector.broadcast %cst_63 : f32 to vector<16x1xf32>
      %226 = arith.addf %222, %225 : vector<16x1xf32>
      %227 = math.rsqrt %226 : vector<16x1xf32>
      %228 = vector.broadcast %227 : vector<16x1xf32> to vector<16x32xf32>
      %229 = arith.mulf %224, %228 : vector<16x32xf32>
      %230 = vector.broadcast %210 : vector<1x32xf32> to vector<16x32xf32>
      %231 = arith.mulf %229, %230 : vector<16x32xf32>
      %232 = vector.broadcast %211 : vector<1x32xf32> to vector<16x32xf32>
      %233 = arith.addf %231, %232 : vector<16x32xf32>
      %c0_64 = arith.constant 0 : index
      %c0_65 = arith.constant 0 : index
      %234 = vector.load %arg16[%c0_64, %c0_65] : memref<16x32xf32, #tpu.memory_space<vmem>>, vector<16x32xf32>
      tpu.vector_store %arg16[%c0_64, %c0_65], %233 {strides = array<i32>} : memref<16x32xf32, #tpu.memory_space<vmem>>, vector<16x32xf32>,
    } else {
    }
    %c0 = arith.constant 0 : index
    %c0_1 = arith.constant 0 : index
    %3 = vector.load %arg16[%c0, %c0_1] : memref<16x32xf32, #tpu.memory_space<vmem>>, vector<16x32xf32>
    %c0_2 = arith.constant 0 : index
    %c0_3 = arith.constant 0 : index
    %c0_4 = arith.constant 0 : index
    %4 = vector.load %arg8[%c0_2, %c0_3, %c0_4] : memref<1x4x96xf32, #tpu.memory_space<vmem>>, vector<1x4x96xf32>
    %5 = vector.shape_cast %4 : vector<1x4x96xf32> to vector<4x96xf32>
    %6 = vector.extract_strided_slice %5 {offsets = [0, 0], sizes = [1, 96], strides = [1, 1]} : vector<4x96xf32> to vector<1x96xf32>
    %7 = vector.extract_strided_slice %5 {offsets = [1, 0], sizes = [1, 32], strides = [1, 1]} : vector<4x96xf32> to vector<1x32xf32>
    %8 = vector.extract_strided_slice %5 {offsets = [1, 32], sizes = [1, 32], strides = [1, 1]} : vector<4x96xf32> to vector<1x32xf32>
    %9 = vector.extract_strided_slice %5 {offsets = [1, 64], sizes = [1, 32], strides = [1, 1]} : vector<4x96xf32> to vector<1x32xf32>
    %10 = vector.extract_strided_slice %5 {offsets = [2, 0], sizes = [1, 64], strides = [1, 1]} : vector<4x96xf32> to vector<1x64xf32>
    %11 = vector.extract_strided_slice %5 {offsets = [3, 0], sizes = [1, 32], strides = [1, 1]} : vector<4x96xf32> to vector<1x32xf32>
    %12 = vector.extract_strided_slice %5 {offsets = [3, 32], sizes = [1, 32], strides = [1, 1]} : vector<4x96xf32> to vector<1x32xf32>
    %13 = vector.extract_strided_slice %5 {offsets = [3, 64], sizes = [1, 32], strides = [1, 1]} : vector<4x96xf32> to vector<1x32xf32>
    %14 = arith.truncf %3 : vector<16x32xf32> to vector<16x32xbf16>
    %c0_5 = arith.constant 0 : index
    %c0_6 = arith.constant 0 : index
    %c0_7 = arith.constant 0 : index
    %15 = vector.load %arg4[%c0_5, %c0_6, %c0_7] : memref<1x32x96xbf16, #tpu.memory_space<vmem>>, vector<1x32x96xbf16>
    %16 = vector.shape_cast %15 : vector<1x32x96xbf16> to vector<32x96xbf16>
    %cst = arith.constant dense<0.000000e+00> : vector<16x96xf32>
    %17 = tpu.matmul %14, %16, %cst {dimension_numbers = #tpu.dot_dimension_numbers<[1], [0], [0], [1], [0, 0, 1, 1], [], []>} : vector<16x32xbf16>, vector<32x96xbf16>, vector<16x96xf32> -> vector<16x96xf32>
    %18 = vector.broadcast %6 : vector<1x96xf32> to vector<16x96xf32>
    %19 = arith.addf %17, %18 : vector<16x96xf32>
    %20 = vector.extract_strided_slice %19 {offsets = [0, 0], sizes = [16, 8], strides = [1, 1]} : vector<16x96xf32> to vector<16x8xf32>
    %21 = vector.extract_strided_slice %19 {offsets = [0, 8], sizes = [16, 8], strides = [1, 1]} : vector<16x96xf32> to vector<16x8xf32>
    %22 = vector.extract_strided_slice %19 {offsets = [0, 16], sizes = [16, 8], strides = [1, 1]} : vector<16x96xf32> to vector<16x8xf32>
    %23 = vector.extract_strided_slice %19 {offsets = [0, 24], sizes = [16, 8], strides = [1, 1]} : vector<16x96xf32> to vector<16x8xf32>
    %24 = vector.shape_cast %20 : vector<16x8xf32> to vector<1x16x8xf32>
    %25 = vector.shape_cast %21 : vector<16x8xf32> to vector<1x16x8xf32>
    %26 = vector.shape_cast %22 : vector<16x8xf32> to vector<1x16x8xf32>
    %27 = vector.shape_cast %23 : vector<16x8xf32> to vector<1x16x8xf32>
    %28 = tpu.concatenate %24, %25, %26, %27 in 0 : vector<1x16x8xf32>, vector<1x16x8xf32>, vector<1x16x8xf32>, vector<1x16x8xf32> -> vector<4x16x8xf32>
    %29 = vector.extract_strided_slice %19 {offsets = [0, 32], sizes = [16, 8], strides = [1, 1]} : vector<16x96xf32> to vector<16x8xf32>
    %30 = vector.extract_strided_slice %19 {offsets = [0, 40], sizes = [16, 8], strides = [1, 1]} : vector<16x96xf32> to vector<16x8xf32>
    %31 = vector.extract_strided_slice %19 {offsets = [0, 48], sizes = [16, 8], strides = [1, 1]} : vector<16x96xf32> to vector<16x8xf32>
    %32 = vector.extract_strided_slice %19 {offsets = [0, 56], sizes = [16, 8], strides = [1, 1]} : vector<16x96xf32> to vector<16x8xf32>
    %33 = vector.shape_cast %29 : vector<16x8xf32> to vector<1x16x8xf32>
    %34 = vector.shape_cast %30 : vector<16x8xf32> to vector<1x16x8xf32>
    %35 = vector.shape_cast %31 : vector<16x8xf32> to vector<1x16x8xf32>
    %36 = vector.shape_cast %32 : vector<16x8xf32> to vector<1x16x8xf32>
    %37 = tpu.concatenate %33, %34, %35, %36 in 0 : vector<1x16x8xf32>, vector<1x16x8xf32>, vector<1x16x8xf32>, vector<1x16x8xf32> -> vector<4x16x8xf32>
    %38 = vector.extract_strided_slice %19 {offsets = [0, 64], sizes = [16, 8], strides = [1, 1]} : vector<16x96xf32> to vector<16x8xf32>
    %39 = vector.extract_strided_slice %19 {offsets = [0, 72], sizes = [16, 8], strides = [1, 1]} : vector<16x96xf32> to vector<16x8xf32>
    %40 = vector.extract_strided_slice %19 {offsets = [0, 80], sizes = [16, 8], strides = [1, 1]} : vector<16x96xf32> to vector<16x8xf32>
    %41 = vector.extract_strided_slice %19 {offsets = [0, 88], sizes = [16, 8], strides = [1, 1]} : vector<16x96xf32> to vector<16x8xf32>
    %42 = vector.shape_cast %38 : vector<16x8xf32> to vector<1x16x8xf32>
    %43 = vector.shape_cast %39 : vector<16x8xf32> to vector<1x16x8xf32>
    %44 = vector.shape_cast %40 : vector<16x8xf32> to vector<1x16x8xf32>
    %45 = vector.shape_cast %41 : vector<16x8xf32> to vector<1x16x8xf32>
    %46 = tpu.concatenate %42, %43, %44, %45 in 0 : vector<1x16x8xf32>, vector<1x16x8xf32>, vector<1x16x8xf32>, vector<1x16x8xf32> -> vector<4x16x8xf32>
    %c0_8 = arith.constant 0 : index
    %c0_9 = arith.constant 0 : index
    %47 = vector.load %arg2[%c0_8, %c0_9] : memref<2x8xf32, #tpu.memory_space<vmem>>, vector<2x8xf32>
    %48 = vector.extract_strided_slice %28 {offsets = [0, 0, 0], sizes = [4, 8, 8], strides = [1, 1, 1]} : vector<4x16x8xf32> to vector<4x8x8xf32>
    %49 = arith.truncf %48 : vector<4x8x8xf32> to vector<4x8x8xbf16>
    %50 = vector.extract_strided_slice %37 {offsets = [0, 0, 0], sizes = [4, 8, 8], strides = [1, 1, 1]} : vector<4x16x8xf32> to vector<4x8x8xf32>
    %51 = arith.truncf %50 : vector<4x8x8xf32> to vector<4x8x8xbf16>
    %52 = vector.extract_strided_slice %46 {offsets = [0, 0, 0], sizes = [4, 8, 8], strides = [1, 1, 1]} : vector<4x16x8xf32> to vector<4x8x8xf32>
    %53 = arith.truncf %52 : vector<4x8x8xf32> to vector<4x8x8xbf16>
    %54 = vector.extract_strided_slice %47 {offsets = [0, 0], sizes = [1, 8], strides = [1, 1]} : vector<2x8xf32> to vector<1x8xf32>
    %cst_10 = arith.constant 5.000000e-01 : f32
    %55 = vector.broadcast %cst_10 : f32 to vector<1x8xf32>
    %56 = arith.cmpf ogt, %54, %55 : vector<1x8xf32>
    %cst_11 = arith.constant 0.000000e+00 : f32
    %cst_12 = arith.constant -1.000000e+09 : f32
    %57 = vector.broadcast %cst_11 : f32 to vector<1x8xf32>
    %58 = vector.broadcast %cst_12 : f32 to vector<1x8xf32>
    %59 = arith.select %56, %57, %58 : vector<1x8xi1>, vector<1x8xf32>
    "tpu.trace_start"() <{level = 10 : i32, message = "hqd,hkd->hqk"}> : () -> ()
    %cst_13 = arith.constant dense<0.000000e+00> : vector<4x8x8xf32>
    %60 = tpu.matmul %49, %51, %cst_13 {dimension_numbers = #tpu.dot_dimension_numbers<[2], [2], [1], [1], [0, 0, 0, 1, 1, 1], [0], [0]>} : vector<4x8x8xbf16>, vector<4x8x8xbf16>, vector<4x8x8xf32> -> vector<4x8x8xf32>
    "tpu.trace_stop"() : () -> ()
    %cst_14 = arith.constant 0.353553385 : f32
    %61 = vector.broadcast %cst_14 : f32 to vector<4x8x8xf32>
    %62 = arith.mulf %60, %61 : vector<4x8x8xf32>
    %63 = vector.shape_cast %59 : vector<1x8xf32> to vector<1x1x8xf32>
    %64 = vector.broadcast %63 : vector<1x1x8xf32> to vector<4x8x8xf32>
    %65 = arith.addf %62, %64 : vector<4x8x8xf32>
    %cst_15 = arith.constant dense<0xFF800000> : vector<4x8xf32>
    %66 = vector.multi_reduction <maximumf>, %65, %cst_15 [2] : vector<4x8x8xf32> to vector<4x8xf32>
    %67 = vector.shape_cast %66 : vector<4x8xf32> to vector<4x8x1xf32>
    %68 = vector.broadcast %67 : vector<4x8x1xf32> to vector<4x8x8xf32>
    %69 = arith.subf %65, %68 : vector<4x8x8xf32>
    %70 = math.exp %69 : vector<4x8x8xf32>
    %cst_16 = arith.constant dense<0.000000e+00> : vector<4x8xf32>
    %71 = vector.multi_reduction <add>, %70, %cst_16 [2] : vector<4x8x8xf32> to vector<4x8xf32>
    %72 = vector.shape_cast %71 : vector<4x8xf32> to vector<4x8x1xf32>
    %73 = tpu.reciprocal %72 {approx = true} : vector<4x8x1xf32> -> vector<4x8x1xf32>
    %74 = vector.broadcast %73 : vector<4x8x1xf32> to vector<4x8x8xf32>
    %75 = arith.mulf %70, %74 : vector<4x8x8xf32>
    %76 = arith.truncf %75 : vector<4x8x8xf32> to vector<4x8x8xbf16>
    "tpu.trace_start"() <{level = 10 : i32, message = "hqk,hkd->hqd"}> : () -> ()
    %cst_17 = arith.constant dense<0.000000e+00> : vector<4x8x8xf32>
    %77 = tpu.matmul %76, %53, %cst_17 {dimension_numbers = #tpu.dot_dimension_numbers<[2], [1], [1], [2], [0, 0, 0, 1, 1, 2], [0], [0]>} : vector<4x8x8xbf16>, vector<4x8x8xbf16>, vector<4x8x8xf32> -> vector<4x8x8xf32>
    "tpu.trace_stop"() : () -> ()
    %78 = vector.extract_strided_slice %77 {offsets = [0, 0, 0], sizes = [1, 8, 8], strides = [1, 1, 1]} : vector<4x8x8xf32> to vector<1x8x8xf32>
    %79 = vector.shape_cast %78 : vector<1x8x8xf32> to vector<8x8xf32>
    %80 = vector.extract_strided_slice %77 {offsets = [1, 0, 0], sizes = [1, 8, 8], strides = [1, 1, 1]} : vector<4x8x8xf32> to vector<1x8x8xf32>
    %81 = vector.shape_cast %80 : vector<1x8x8xf32> to vector<8x8xf32>
    %82 = vector.extract_strided_slice %77 {offsets = [2, 0, 0], sizes = [1, 8, 8], strides = [1, 1, 1]} : vector<4x8x8xf32> to vector<1x8x8xf32>
    %83 = vector.shape_cast %82 : vector<1x8x8xf32> to vector<8x8xf32>
    %84 = vector.extract_strided_slice %77 {offsets = [3, 0, 0], sizes = [1, 8, 8], strides = [1, 1, 1]} : vector<4x8x8xf32> to vector<1x8x8xf32>
    %85 = vector.shape_cast %84 : vector<1x8x8xf32> to vector<8x8xf32>
    %86 = tpu.concatenate %79, %81, %83, %85 in 1 : vector<8x8xf32>, vector<8x8xf32>, vector<8x8xf32>, vector<8x8xf32> -> vector<8x32xf32>
    %87 = vector.extract_strided_slice %28 {offsets = [0, 8, 0], sizes = [4, 8, 8], strides = [1, 1, 1]} : vector<4x16x8xf32> to vector<4x8x8xf32>
    %88 = arith.truncf %87 : vector<4x8x8xf32> to vector<4x8x8xbf16>
    %89 = vector.extract_strided_slice %37 {offsets = [0, 8, 0], sizes = [4, 8, 8], strides = [1, 1, 1]} : vector<4x16x8xf32> to vector<4x8x8xf32>
    %90 = arith.truncf %89 : vector<4x8x8xf32> to vector<4x8x8xbf16>
    %91 = vector.extract_strided_slice %46 {offsets = [0, 8, 0], sizes = [4, 8, 8], strides = [1, 1, 1]} : vector<4x16x8xf32> to vector<4x8x8xf32>
    %92 = arith.truncf %91 : vector<4x8x8xf32> to vector<4x8x8xbf16>
    %93 = vector.extract_strided_slice %47 {offsets = [1, 0], sizes = [1, 8], strides = [1, 1]} : vector<2x8xf32> to vector<1x8xf32>
    %cst_18 = arith.constant 5.000000e-01 : f32
    %94 = vector.broadcast %cst_18 : f32 to vector<1x8xf32>
    %95 = arith.cmpf ogt, %93, %94 : vector<1x8xf32>
    %cst_19 = arith.constant 0.000000e+00 : f32
    %cst_20 = arith.constant -1.000000e+09 : f32
    %96 = vector.broadcast %cst_19 : f32 to vector<1x8xf32>
    %97 = vector.broadcast %cst_20 : f32 to vector<1x8xf32>
    %98 = arith.select %95, %96, %97 : vector<1x8xi1>, vector<1x8xf32>
    "tpu.trace_start"() <{level = 10 : i32, message = "hqd,hkd->hqk"}> : () -> ()
    %cst_21 = arith.constant dense<0.000000e+00> : vector<4x8x8xf32>
    %99 = tpu.matmul %88, %90, %cst_21 {dimension_numbers = #tpu.dot_dimension_numbers<[2], [2], [1], [1], [0, 0, 0, 1, 1, 1], [0], [0]>} : vector<4x8x8xbf16>, vector<4x8x8xbf16>, vector<4x8x8xf32> -> vector<4x8x8xf32>
    "tpu.trace_stop"() : () -> ()
    %cst_22 = arith.constant 0.353553385 : f32
    %100 = vector.broadcast %cst_22 : f32 to vector<4x8x8xf32>
    %101 = arith.mulf %99, %100 : vector<4x8x8xf32>
    %102 = vector.shape_cast %98 : vector<1x8xf32> to vector<1x1x8xf32>
    %103 = vector.broadcast %102 : vector<1x1x8xf32> to vector<4x8x8xf32>
    %104 = arith.addf %101, %103 : vector<4x8x8xf32>
    %cst_23 = arith.constant dense<0xFF800000> : vector<4x8xf32>
    %105 = vector.multi_reduction <maximumf>, %104, %cst_23 [2] : vector<4x8x8xf32> to vector<4x8xf32>
    %106 = vector.shape_cast %105 : vector<4x8xf32> to vector<4x8x1xf32>
    %107 = vector.broadcast %106 : vector<4x8x1xf32> to vector<4x8x8xf32>
    %108 = arith.subf %104, %107 : vector<4x8x8xf32>
    %109 = math.exp %108 : vector<4x8x8xf32>
    %cst_24 = arith.constant dense<0.000000e+00> : vector<4x8xf32>
    %110 = vector.multi_reduction <add>, %109, %cst_24 [2] : vector<4x8x8xf32> to vector<4x8xf32>
    %111 = vector.shape_cast %110 : vector<4x8xf32> to vector<4x8x1xf32>
    %112 = tpu.reciprocal %111 {approx = true} : vector<4x8x1xf32> -> vector<4x8x1xf32>
    %113 = vector.broadcast %112 : vector<4x8x1xf32> to vector<4x8x8xf32>
    %114 = arith.mulf %109, %113 : vector<4x8x8xf32>
    %115 = arith.truncf %114 : vector<4x8x8xf32> to vector<4x8x8xbf16>
    "tpu.trace_start"() <{level = 10 : i32, message = "hqk,hkd->hqd"}> : () -> ()
    %cst_25 = arith.constant dense<0.000000e+00> : vector<4x8x8xf32>
    %116 = tpu.matmul %115, %92, %cst_25 {dimension_numbers = #tpu.dot_dimension_numbers<[2], [1], [1], [2], [0, 0, 0, 1, 1, 2], [0], [0]>} : vector<4x8x8xbf16>, vector<4x8x8xbf16>, vector<4x8x8xf32> -> vector<4x8x8xf32>
    "tpu.trace_stop"() : () -> ()
    %117 = vector.extract_strided_slice %116 {offsets = [0, 0, 0], sizes = [1, 8, 8], strides = [1, 1, 1]} : vector<4x8x8xf32> to vector<1x8x8xf32>
    %118 = vector.shape_cast %117 : vector<1x8x8xf32> to vector<8x8xf32>
    %119 = vector.extract_strided_slice %116 {offsets = [1, 0, 0], sizes = [1, 8, 8], strides = [1, 1, 1]} : vector<4x8x8xf32> to vector<1x8x8xf32>
    %120 = vector.shape_cast %119 : vector<1x8x8xf32> to vector<8x8xf32>
    %121 = vector.extract_strided_slice %116 {offsets = [2, 0, 0], sizes = [1, 8, 8], strides = [1, 1, 1]} : vector<4x8x8xf32> to vector<1x8x8xf32>
    %122 = vector.shape_cast %121 : vector<1x8x8xf32> to vector<8x8xf32>
    %123 = vector.extract_strided_slice %116 {offsets = [3, 0, 0], sizes = [1, 8, 8], strides = [1, 1, 1]} : vector<4x8x8xf32> to vector<1x8x8xf32>
    %124 = vector.shape_cast %123 : vector<1x8x8xf32> to vector<8x8xf32>
    %125 = tpu.concatenate %118, %120, %122, %124 in 1 : vector<8x8xf32>, vector<8x8xf32>, vector<8x8xf32>, vector<8x8xf32> -> vector<8x32xf32>
    %126 = tpu.concatenate %86, %125 in 0 : vector<8x32xf32>, vector<8x32xf32> -> vector<16x32xf32>
    %127 = arith.truncf %126 : vector<16x32xf32> to vector<16x32xbf16>
    %c0_26 = arith.constant 0 : index
    %c0_27 = arith.constant 0 : index
    %c0_28 = arith.constant 0 : index
    %128 = vector.load %arg5[%c0_26, %c0_27, %c0_28] : memref<1x32x32xbf16, #tpu.memory_space<vmem>>, vector<1x32x32xbf16>
    %129 = vector.shape_cast %128 : vector<1x32x32xbf16> to vector<32x32xbf16>
    %cst_29 = arith.constant dense<0.000000e+00> : vector<16x32xf32>
    %130 = tpu.matmul %127, %129, %cst_29 {dimension_numbers = #tpu.dot_dimension_numbers<[1], [0], [0], [1], [0, 0, 1, 1], [], []>} : vector<16x32xbf16>, vector<32x32xbf16>, vector<16x32xf32> -> vector<16x32xf32>
    %131 = vector.broadcast %7 : vector<1x32xf32> to vector<16x32xf32>
    %132 = arith.addf %130, %131 : vector<16x32xf32>
    %133 = arith.addf %3, %132 : vector<16x32xf32>
    %cst_30 = arith.constant dense<0.000000e+00> : vector<16xf32>
    %134 = vector.multi_reduction <add>, %133, %cst_30 [1] : vector<16x32xf32> to vector<16xf32>
    %135 = vector.shape_cast %134 : vector<16xf32> to vector<16x1xf32>
    %cst_31 = arith.constant 3.200000e+01 : f32
    %136 = vector.broadcast %cst_31 : f32 to vector<16x1xf32>
    %137 = arith.divf %135, %136 : vector<16x1xf32>
    %138 = vector.broadcast %137 : vector<16x1xf32> to vector<16x32xf32>
    %139 = arith.subf %133, %138 : vector<16x32xf32>
    %140 = arith.mulf %139, %139 : vector<16x32xf32>
    %cst_32 = arith.constant dense<0.000000e+00> : vector<16xf32>
    %141 = vector.multi_reduction <add>, %140, %cst_32 [1] : vector<16x32xf32> to vector<16xf32>
    %142 = vector.shape_cast %141 : vector<16xf32> to vector<16x1xf32>
    %cst_33 = arith.constant 3.200000e+01 : f32
    %143 = vector.broadcast %cst_33 : f32 to vector<16x1xf32>
    %144 = arith.divf %142, %143 : vector<16x1xf32>
    %145 = vector.broadcast %137 : vector<16x1xf32> to vector<16x32xf32>
    %146 = arith.subf %133, %145 : vector<16x32xf32>
    %cst_34 = arith.constant 9.99999996E-13 : f32
    %147 = vector.broadcast %cst_34 : f32 to vector<16x1xf32>
    %148 = arith.addf %144, %147 : vector<16x1xf32>
    %149 = math.rsqrt %148 : vector<16x1xf32>
    %150 = vector.broadcast %149 : vector<16x1xf32> to vector<16x32xf32>
    %151 = arith.mulf %146, %150 : vector<16x32xf32>
    %152 = vector.broadcast %8 : vector<1x32xf32> to vector<16x32xf32>
    %153 = arith.mulf %151, %152 : vector<16x32xf32>
    %154 = vector.broadcast %9 : vector<1x32xf32> to vector<16x32xf32>
    %155 = arith.addf %153, %154 : vector<16x32xf32>
    %156 = arith.truncf %155 : vector<16x32xf32> to vector<16x32xbf16>
    %c0_35 = arith.constant 0 : index
    %c0_36 = arith.constant 0 : index
    %c0_37 = arith.constant 0 : index
    %157 = vector.load %arg6[%c0_35, %c0_36, %c0_37] : memref<1x32x64xbf16, #tpu.memory_space<vmem>>, vector<1x32x64xbf16>
    %158 = vector.shape_cast %157 : vector<1x32x64xbf16> to vector<32x64xbf16>
    %cst_38 = arith.constant dense<0.000000e+00> : vector<16x64xf32>
    %159 = tpu.matmul %156, %158, %cst_38 {dimension_numbers = #tpu.dot_dimension_numbers<[1], [0], [0], [1], [0, 0, 1, 1], [], []>} : vector<16x32xbf16>, vector<32x64xbf16>, vector<16x64xf32> -> vector<16x64xf32>
    %160 = vector.broadcast %10 : vector<1x64xf32> to vector<16x64xf32>
    %161 = arith.addf %159, %160 : vector<16x64xf32>
    %cst_39 = arith.constant 5.000000e-01 : f32
    %162 = vector.broadcast %cst_39 : f32 to vector<16x64xf32>
    %163 = arith.mulf %162, %161 : vector<16x64xf32>
    %cst_40 = arith.constant 4.471500e-02 : f32
    %164 = vector.broadcast %cst_40 : f32 to vector<16x64xf32>
    %165 = arith.mulf %164, %161 : vector<16x64xf32>
    %166 = arith.mulf %165, %161 : vector<16x64xf32>
    %167 = arith.mulf %166, %161 : vector<16x64xf32>
    %168 = arith.addf %161, %167 : vector<16x64xf32>
    %cst_41 = arith.constant 0.797884583 : f32
    %169 = vector.broadcast %cst_41 : f32 to vector<16x64xf32>
    %170 = arith.mulf %169, %168 : vector<16x64xf32>
    %171 = math.tanh %170 : vector<16x64xf32>
    %cst_42 = arith.constant 1.000000e+00 : f32
    %172 = vector.broadcast %cst_42 : f32 to vector<16x64xf32>
    %173 = arith.addf %172, %171 : vector<16x64xf32>
    %174 = arith.mulf %163, %173 : vector<16x64xf32>
    %175 = arith.truncf %174 : vector<16x64xf32> to vector<16x64xbf16>
    %c0_43 = arith.constant 0 : index
    %c0_44 = arith.constant 0 : index
    %c0_45 = arith.constant 0 : index
    %176 = vector.load %arg7[%c0_43, %c0_44, %c0_45] : memref<1x64x32xbf16, #tpu.memory_space<vmem>>, vector<1x64x32xbf16>
    %177 = vector.shape_cast %176 : vector<1x64x32xbf16> to vector<64x32xbf16>
    %cst_46 = arith.constant dense<0.000000e+00> : vector<16x32xf32>
    %178 = tpu.matmul %175, %177, %cst_46 {dimension_numbers = #tpu.dot_dimension_numbers<[1], [0], [0], [1], [0, 0, 1, 1], [], []>} : vector<16x64xbf16>, vector<64x32xbf16>, vector<16x32xf32> -> vector<16x32xf32>
    %179 = vector.broadcast %11 : vector<1x32xf32> to vector<16x32xf32>
    %180 = arith.addf %178, %179 : vector<16x32xf32>
    %181 = arith.addf %155, %180 : vector<16x32xf32>
    %cst_47 = arith.constant dense<0.000000e+00> : vector<16xf32>
    %182 = vector.multi_reduction <add>, %181, %cst_47 [1] : vector<16x32xf32> to vector<16xf32>
    %183 = vector.shape_cast %182 : vector<16xf32> to vector<16x1xf32>
    %cst_48 = arith.constant 3.200000e+01 : f32
    %184 = vector.broadcast %cst_48 : f32 to vector<16x1xf32>
    %185 = arith.divf %183, %184 : vector<16x1xf32>
    %186 = vector.broadcast %185 : vector<16x1xf32> to vector<16x32xf32>
    %187 = arith.subf %181, %186 : vector<16x32xf32>
    %188 = arith.mulf %187, %187 : vector<16x32xf32>
    %cst_49 = arith.constant dense<0.000000e+00> : vector<16xf32>
    %189 = vector.multi_reduction <add>, %188, %cst_49 [1] : vector<16x32xf32> to vector<16xf32>
    %190 = vector.shape_cast %189 : vector<16xf32> to vector<16x1xf32>
    %cst_50 = arith.constant 3.200000e+01 : f32
    %191 = vector.broadcast %cst_50 : f32 to vector<16x1xf32>
    %192 = arith.divf %190, %191 : vector<16x1xf32>
    %193 = vector.broadcast %185 : vector<16x1xf32> to vector<16x32xf32>
    %194 = arith.subf %181, %193 : vector<16x32xf32>
    %cst_51 = arith.constant 9.99999996E-13 : f32
    %195 = vector.broadcast %cst_51 : f32 to vector<16x1xf32>
    %196 = arith.addf %192, %195 : vector<16x1xf32>
    %197 = math.rsqrt %196 : vector<16x1xf32>
    %198 = vector.broadcast %197 : vector<16x1xf32> to vector<16x32xf32>
    %199 = arith.mulf %194, %198 : vector<16x32xf32>
    %200 = vector.broadcast %12 : vector<1x32xf32> to vector<16x32xf32>
    %201 = arith.mulf %199, %200 : vector<16x32xf32>
    %202 = vector.broadcast %13 : vector<1x32xf32> to vector<16x32xf32>
    %203 = arith.addf %201, %202 : vector<16x32xf32>
    %c0_52 = arith.constant 0 : index
    %c0_53 = arith.constant 0 : index
    %204 = vector.load %arg16[%c0_52, %c0_53] : memref<16x32xf32, #tpu.memory_space<vmem>>, vector<16x32xf32>
    tpu.vector_store %arg16[%c0_52, %c0_53], %203 {strides = array<i32>} : memref<16x32xf32, #tpu.memory_space<vmem>>, vector<16x32xf32>,
    %c1_i32 = arith.constant 1 : i32
    %205 = arith.cmpi eq, %arg0, %c1_i32 : i32
    %206 = arith.extui %205 : i1 to i32
    %c0_i32_54 = arith.constant 0 : i32
    %207 = arith.cmpi ne, %206, %c0_i32_54 : i32
    scf.if %207 {
      %208 = vector.extract_strided_slice %203 {offsets = [0, 0], sizes = [1, 32], strides = [1, 1]} : vector<16x32xf32> to vector<1x32xf32>
      %209 = vector.extract_strided_slice %203 {offsets = [8, 0], sizes = [1, 32], strides = [1, 1]} : vector<16x32xf32> to vector<1x32xf32>
      %210 = tpu.concatenate %208, %209 in 0 : vector<1x32xf32>, vector<1x32xf32> -> vector<2x32xf32>
      %211 = arith.truncf %210 : vector<2x32xf32> to vector<2x32xbf16>
      %c0_55 = arith.constant 0 : index
      %c0_56 = arith.constant 0 : index
      %212 = vector.load %arg9[%c0_55, %c0_56] : memref<32x32xbf16, #tpu.memory_space<vmem>>, vector<32x32xbf16>
      %cst_57 = arith.constant dense<0.000000e+00> : vector<2x32xf32>
      %213 = tpu.matmul %211, %212, %cst_57 {dimension_numbers = #tpu.dot_dimension_numbers<[1], [0], [0], [1], [0, 0, 1, 1], [], []>} : vector<2x32xbf16>, vector<32x32xbf16>, vector<2x32xf32> -> vector<2x32xf32>
      %c0_58 = arith.constant 0 : index
      %c0_59 = arith.constant 0 : index
      %214 = vector.load %arg10[%c0_58, %c0_59] : memref<1x32xf32, #tpu.memory_space<vmem>>, vector<1x32xf32>
      %215 = vector.broadcast %214 : vector<1x32xf32> to vector<2x32xf32>
      %216 = arith.addf %213, %215 : vector<2x32xf32>
      %217 = math.tanh %216 : vector<2x32xf32>
      %218 = arith.truncf %217 : vector<2x32xf32> to vector<2x32xbf16>
      %c0_60 = arith.constant 0 : index
      %c0_61 = arith.constant 0 : index
      %219 = vector.load %arg11[%c0_60, %c0_61] : memref<32x8xbf16, #tpu.memory_space<vmem>>, vector<32x8xbf16>
      %cst_62 = arith.constant dense<0.000000e+00> : vector<2x8xf32>
      %220 = tpu.matmul %218, %219, %cst_62 {dimension_numbers = #tpu.dot_dimension_numbers<[1], [0], [0], [1], [0, 0, 1, 1], [], []>} : vector<2x32xbf16>, vector<32x8xbf16>, vector<2x8xf32> -> vector<2x8xf32>
      %c0_63 = arith.constant 0 : index
      %c0_64 = arith.constant 0 : index
      %221 = vector.load %arg12[%c0_63, %c0_64] : memref<1x8xf32, #tpu.memory_space<vmem>>, vector<1x8xf32>
      %222 = vector.broadcast %221 : vector<1x8xf32> to vector<2x8xf32>
      %223 = arith.addf %220, %222 : vector<2x8xf32>
      %c0_65 = arith.constant 0 : index
      %c0_66 = arith.constant 0 : index
      %224 = vector.load %arg14[%c0_65, %c0_66] : memref<2x8xf32, #tpu.memory_space<vmem>>, vector<2x8xf32>
      tpu.vector_store %arg14[%c0_65, %c0_66], %223 {strides = array<i32>} : memref<2x8xf32, #tpu.memory_space<vmem>>, vector<2x8xf32>,
      %cst_67 = arith.constant dense<0xFF800000> : vector<2xf32>
      %225 = vector.multi_reduction <maximumf>, %223, %cst_67 [1] : vector<2x8xf32> to vector<2xf32>
      %226 = vector.shape_cast %225 : vector<2xf32> to vector<2x1xf32>
      %227 = vector.broadcast %226 : vector<2x1xf32> to vector<2x8xf32>
      %228 = arith.subf %223, %227 : vector<2x8xf32>
      %229 = math.exp %228 : vector<2x8xf32>
      %cst_68 = arith.constant dense<0.000000e+00> : vector<2xf32>
      %230 = vector.multi_reduction <add>, %229, %cst_68 [1] : vector<2x8xf32> to vector<2xf32>
      %231 = vector.shape_cast %230 : vector<2xf32> to vector<2x1xf32>
      %232 = math.log %231 : vector<2x1xf32>
      %233 = arith.addf %226, %232 : vector<2x1xf32>
      %c0_69 = arith.constant 0 : index
      %c0_70 = arith.constant 0 : index
      %234 = vector.load %arg13[%c0_69, %c0_70] : memref<2x8xf32, #tpu.memory_space<vmem>>, vector<2x8xf32>
      %235 = arith.mulf %234, %223 : vector<2x8xf32>
      %cst_71 = arith.constant dense<0.000000e+00> : vector<2xf32>
      %236 = vector.multi_reduction <add>, %235, %cst_71 [1] : vector<2x8xf32> to vector<2xf32>
      %237 = vector.shape_cast %236 : vector<2xf32> to vector<2x1xf32>
      %238 = arith.subf %233, %237 : vector<2x1xf32>
      %cst_72 = arith.constant dense<0.000000e+00> : vector<1xf32>
      %239 = vector.multi_reduction <add>, %238, %cst_72 [0] : vector<2x1xf32> to vector<1xf32>
      %240 = vector.shape_cast %239 : vector<1xf32> to vector<1x1xf32>
      %cst_73 = arith.constant 5.000000e-01 : f32
      %241 = vector.broadcast %cst_73 : f32 to vector<1x1xf32>
      %242 = arith.mulf %240, %241 : vector<1x1xf32>
      %c0_74 = arith.constant 0 : index
      %c0_75 = arith.constant 0 : index
      %243 = vector.load %arg15[%c0_74, %c0_75] : memref<1x1xf32, #tpu.memory_space<vmem>>, vector<1x1xf32>
      tpu.vector_store %arg15[%c0_74, %c0_75], %242 {strides = array<i32>} : memref<1x1xf32, #tpu.memory_space<vmem>>, vector<1x1xf32>,
    } else {
    }
    return
  }
  func.func @transform_0(%arg0: i32) -> (i32, i32) {
    %c0_i32 = arith.constant 0 : i32
    %c0_i32_0 = arith.constant 0 : i32
    %c0_i32_1 = arith.constant 0 : i32
    return %c0_i32, %c0_i32_0 : i32, i32
  }
  func.func @transform_1(%arg0: i32) -> (i32, i32) {
    %c0_i32 = arith.constant 0 : i32
    %c0_i32_0 = arith.constant 0 : i32
    %c0_i32_1 = arith.constant 0 : i32
    return %c0_i32, %c0_i32_0 : i32, i32
  }
  func.func @transform_2(%arg0: i32) -> (i32, i32) {
    %c0_i32 = arith.constant 0 : i32
    %c0_i32_0 = arith.constant 0 : i32
    %c0_i32_1 = arith.constant 0 : i32
    return %c0_i32, %c0_i32_0 : i32, i32
  }
  func.func @transform_3(%arg0: i32) -> (i32, i32, i32) {
    %c0_i32 = arith.constant 0 : i32
    %c0_i32_0 = arith.constant 0 : i32
    %c0_i32_1 = arith.constant 0 : i32
    return %arg0, %c0_i32, %c0_i32_0 : i32, i32, i32
  }
  func.func @transform_4(%arg0: i32) -> (i32, i32, i32) {
    %c0_i32 = arith.constant 0 : i32
    %c0_i32_0 = arith.constant 0 : i32
    %c0_i32_1 = arith.constant 0 : i32
    return %arg0, %c0_i32, %c0_i32_0 : i32, i32, i32
  }
  func.func @transform_5(%arg0: i32) -> (i32, i32, i32) {
    %c0_i32 = arith.constant 0 : i32
    %c0_i32_0 = arith.constant 0 : i32
    %c0_i32_1 = arith.constant 0 : i32
    return %arg0, %c0_i32, %c0_i32_0 : i32, i32, i32
  }
  func.func @transform_6(%arg0: i32) -> (i32, i32, i32) {
    %c0_i32 = arith.constant 0 : i32
    %c0_i32_0 = arith.constant 0 : i32
    %c0_i32_1 = arith.constant 0 : i32
    return %arg0, %c0_i32, %c0_i32_0 : i32, i32, i32
  }
  func.func @transform_7(%arg0: i32) -> (i32, i32, i32) {
    %c0_i32 = arith.constant 0 : i32
    %c0_i32_0 = arith.constant 0 : i32
    %c0_i32_1 = arith.constant 0 : i32
    return %arg0, %c0_i32, %c0_i32_0 : i32, i32, i32
  }
  func.func @transform_8(%arg0: i32) -> (i32, i32) {
    %c0_i32 = arith.constant 0 : i32
    %c0_i32_0 = arith.constant 0 : i32
    %c0_i32_1 = arith.constant 0 : i32
    return %c0_i32, %c0_i32_0 : i32, i32
  }
  func.func @transform_9(%arg0: i32) -> (i32, i32) {
    %c0_i32 = arith.constant 0 : i32
    %c0_i32_0 = arith.constant 0 : i32
    %c0_i32_1 = arith.constant 0 : i32
    return %c0_i32, %c0_i32_0 : i32, i32
  }
  func.func @transform_10(%arg0: i32) -> (i32, i32) {
    %c0_i32 = arith.constant 0 : i32
    %c0_i32_0 = arith.constant 0 : i32
    %c0_i32_1 = arith.constant 0 : i32
    return %c0_i32, %c0_i32_0 : i32, i32
  }
  func.func @transform_11(%arg0: i32) -> (i32, i32) {
    %c0_i32 = arith.constant 0 : i32
    %c0_i32_0 = arith.constant 0 : i32
    %c0_i32_1 = arith.constant 0 : i32
    return %c0_i32, %c0_i32_0 : i32, i32
  }
  func.func @transform_12(%arg0: i32) -> (i32, i32) {
    %c0_i32 = arith.constant 0 : i32
    %c0_i32_0 = arith.constant 0 : i32
    %c0_i32_1 = arith.constant 0 : i32
    return %c0_i32, %c0_i32_0 : i32, i32
  }
  func.func @transform_13(%arg0: i32) -> (i32, i32) {
    %c0_i32 = arith.constant 0 : i32
    %c0_i32_0 = arith.constant 0 : i32
    %c0_i32_1 = arith.constant 0 : i32
    return %c0_i32, %c0_i32_0 : i32, i32
  }
  func.func @transform_14(%arg0: i32) -> (i32, i32) {
    %c0_i32 = arith.constant 0 : i32
    %c0_i32_0 = arith.constant 0 : i32
    %c0_i32_1 = arith.constant 0 : i32
    return %c0_i32, %c0_i32_0 : i32, i32
  }
}

</mosaic_0001>

<llo_original>
// kernel: action_bert_forward.1
$region0: #{action_bert_forward.1}
  #allocation0 [shape = 'u32[]', space=smem, size = 0x4, offset = 0x4, fixed_abs, tag = 'smem constant byte address 0x4 - core index']
  #allocation1 [shape = 'u32[144,128]{1,0:T(1,128)}', space=vmem, size = 0x12000, scoped, tag = 'internal scratch']
  #allocation2 [shape = 'f32[16,32]{1,0:T(8,128)}', space=vmem, size = 0x2000, scoped, tag = 'scratch operand']
  %s0 = inlined_call_operand.vmem [shape: f32[16,32], index: 0, kind: input, shape index: {}]
  %s1 = inlined_call_operand.vmem [shape: f32[2,8], index: 1, kind: input, shape index: {}]
  %s2 = inlined_call_operand.vmem [shape: f32[2,32], index: 2, kind: input, shape index: {}]
  %s3 = inlined_call_operand.vmem [shape: bf16[2,32,96], index: 3, kind: input, shape index: {}]
  %s4 = inlined_call_operand.vmem [shape: bf16[2,32,32], index: 4, kind: input, shape index: {}]
  %s5 = inlined_call_operand.vmem [shape: bf16[2,32,64], index: 5, kind: input, shape index: {}]
  %s6 = inlined_call_operand.vmem [shape: bf16[2,64,32], index: 6, kind: input, shape index: {}]
  %s7 = inlined_call_operand.vmem [shape: f32[2,4,96], index: 7, kind: input, shape index: {}]
  %s8 = inlined_call_operand.vmem [shape: bf16[32,32], index: 8, kind: input, shape index: {}]
  %s9 = inlined_call_operand.vmem [shape: f32[1,32], index: 9, kind: input, shape index: {}]
  %s10 = inlined_call_operand.vmem [shape: bf16[32,8], index: 10, kind: input, shape index: {}]
  %s11 = inlined_call_operand.vmem [shape: f32[1,8], index: 11, kind: input, shape index: {}]
  %s12 = inlined_call_operand.vmem [shape: f32[2,8], index: 12, kind: input, shape index: {}]
  %s13 = inlined_call_operand.hbm [shape: f32[2,8], index: 13, kind: output, shape index: {0}]
  %s14 = inlined_call_operand.hbm [shape: f32[1,1], index: 14, kind: output, shape index: {1}]
  %15 = xla_tuple %s13, %s14
  %s16 = sld [smem:[#allocation0]]
  $region101: #{action_bert_forward.1} parent=0
    _
  %s18 = ssub.s32 1, %s16
  %s19 = scalar_select 0, %s18, %s16
  $region1: #{action_bert_forward.1} parent=0
    #allocation3 [shape = 'u8[1024]{0}', space=vmem, size = 0x400, scoped, tag = 'output window, operand 0, single buffered']
    #allocation4 [shape = 's32[2]{0}', space=sflag, size = 0x8, scoped, tag = 'scoped memory for action_bert_forward.1']
    #allocation5 [shape = 'u8[512]{0}', space=vmem, size = 0x400, scoped, tag = 'output window, operand 1, single buffered']
    #allocation6 [shape = 's32[1]{0}', space=sflag, size = 0x4, scoped, tag = 'scoped memory for action_bert_forward.1']
    %20 = vsyncpa [#allocation4], 0
    %21 = vsyncpa [#allocation6], 0
    loop: start=0, step=1, limit=4
    $region2: #{action_bert_forward.1} parent=1 // loop_pre_header
      _
    $region3: #{action_bert_forward.1} parent=1 // loop_header
      %s23 = sphi 0, %s27
      %p24 = scmp.ge.s32.totalorder %s23, 4
      %s31 = sphi 0, %s31
      %s33 = sphi 0, %s31
      %s34 = sphi 0, %s33
      %s48 = sphi 0, %s34
      %s52 = sphi 0, %s52
      %s54 = sphi 0, %s52
      %s55 = sphi 0, %s54
      %s69 = sphi 0, %s55
      %s73 = sphi 0, %s73
      %s75 = sphi 0, %s73
      %s76 = sphi 0, %s75
      %s90 = sphi 0, %s76
      %s96 = sphi 0, %s98
      %s99 = sphi 0, %s96
      %s100 = sphi 0, %s99
      %s116 = sphi 0, %s100
      %s122 = sphi 0, %s124
      %s125 = sphi 0, %s122
      %s126 = sphi 0, %s125
      %s142 = sphi 0, %s126
      %s148 = sphi 0, %s150
      %s151 = sphi 0, %s148
      %s152 = sphi 0, %s151
      %s168 = sphi 0, %s152
      %s174 = sphi 0, %s176
      %s177 = sphi 0, %s174
      %s178 = sphi 0, %s177
      %s194 = sphi 0, %s178
      %s200 = sphi 0, %s202
      %s203 = sphi 0, %s200
      %s204 = sphi 0, %s203
      %s220 = sphi 0, %s204
      %s224 = sphi 0, %s224
      %s226 = sphi 0, %s224
      %s227 = sphi 0, %s226
      %s241 = sphi 0, %s227
      %s245 = sphi 0, %s245
      %s247 = sphi 0, %s245
      %s248 = sphi 0, %s247
      %s262 = sphi 0, %s248
      %s266 = sphi 0, %s266
      %s268 = sphi 0, %s266
      %s269 = sphi 0, %s268
      %s283 = sphi 0, %s269
      %s287 = sphi 0, %s287
      %s289 = sphi 0, %s287
      %s290 = sphi 0, %s289
      %s304 = sphi 0, %s290
      %s308 = sphi 0, %s308
      %s310 = sphi 0, %s308
      %s311 = sphi 0, %s310
      %s325 = sphi 0, %s311
      %s329 = sphi 0, %s329
      %s331 = sphi 0, %s329
      %s332 = sphi 0, %s331
      %s346 = sphi 0, %s332
      %s350 = sphi 0, %s350
      %s352 = sphi 0, %s350
      %s353 = sphi 0, %s352
      %s367 = sphi 0, %s353
    $region4: #{action_bert_forward.1} parent=1 // loop_header_branch
      %26 = sbr.rel (%p24) target = $region8
    $region5: #{action_bert_forward.1} parent=1 // loop_body
      %s28 = ssub.s32 %s23, 1
      %s29 = ssub.s32 %s23, 2
      %s30 = sadd.s32 %s23, 1
      %s32 = sadd.s32 %s31, 1
      %p35 = scmp.eq.s32.totalorder %s23, 1
      %p36 = scmp.ne.s32.totalorder %s31, %s33
      %p37 = scmp.eq.s32.totalorder %s23, 0
      %p38 = por %p36, %p37
      %p39 = scmp.ne.s32.totalorder %s31, %s33
      %p40 = scmp.eq.s32.totalorder %s28, 1
      %p41 = por %p39, %p40
      %p42 = scmp.ne.s32.totalorder %s33, %s34
      %p43 = scmp.eq.s32.totalorder %s28, 0
      %p44 = por %p42, %p43
      %p45 = scmp.ne.s32.totalorder %s33, %s34
      %p46 = scmp.eq.s32.totalorder %s29, 1
      %p47 = por %p45, %p46
      %p49 = scmp.ne.s32.totalorder %s34, %s48
      %p50 = scmp.eq.s32.totalorder %s29, 0
      %p51 = por %p49, %p50
      %s53 = sadd.s32 %s52, 1
      %p56 = scmp.eq.s32.totalorder %s23, 1
      %p57 = scmp.ne.s32.totalorder %s52, %s54
      %p58 = scmp.eq.s32.totalorder %s23, 0
      %p59 = por %p57, %p58
      %p60 = scmp.ne.s32.totalorder %s52, %s54
      %p61 = scmp.eq.s32.totalorder %s28, 1
      %p62 = por %p60, %p61
      %p63 = scmp.ne.s32.totalorder %s54, %s55
      %p64 = scmp.eq.s32.totalorder %s28, 0
      %p65 = por %p63, %p64
      %p66 = scmp.ne.s32.totalorder %s54, %s55
      %p67 = scmp.eq.s32.totalorder %s29, 1
      %p68 = por %p66, %p67
      %p70 = scmp.ne.s32.totalorder %s55, %s69
      %p71 = scmp.eq.s32.totalorder %s29, 0
      %p72 = por %p70, %p71
      %s74 = sadd.s32 %s73, 1
      %p77 = scmp.eq.s32.totalorder %s23, 1
      %p78 = scmp.ne.s32.totalorder %s73, %s75
      %p79 = scmp.eq.s32.totalorder %s23, 0
      %p80 = por %p78, %p79
      %p81 = scmp.ne.s32.totalorder %s73, %s75
      %p82 = scmp.eq.s32.totalorder %s28, 1
      %p83 = por %p81, %p82
      %p84 = scmp.ne.s32.totalorder %s75, %s76
      %p85 = scmp.eq.s32.totalorder %s28, 0
      %p86 = por %p84, %p85
      %p87 = scmp.ne.s32.totalorder %s75, %s76
      %p88 = scmp.eq.s32.totalorder %s29, 1
      %p89 = por %p87, %p88
      %p91 = scmp.ne.s32.totalorder %s76, %s90
      %p92 = scmp.eq.s32.totalorder %s29, 0
      %p93 = por %p91, %p92
      %s94 = ssub.s32 %s23, %s30
      %p95 = scmp.eq.s32.totalorder %s94, 0
      %s97 = sadd.s32 %s96, 1
      %s98 = scalar_select %p95, %s96, %s97
      %p101 = pneg %p95
      %p102 = scmp.eq.s32.totalorder %s23, 1
      %p103 = por %p101, %p102
      %p104 = scmp.ne.s32.totalorder %s96, %s99
      %p105 = scmp.eq.s32.totalorder %s23, 0
      %p106 = por %p104, %p105
      %p107 = scmp.ne.s32.totalorder %s96, %s99
      %p108 = scmp.eq.s32.totalorder %s28, 1
      %p109 = por %p107, %p108
      %p110 = scmp.ne.s32.totalorder %s99, %s100
      %p111 = scmp.eq.s32.totalorder %s28, 0
      %p112 = por %p110, %p111
      %p113 = scmp.ne.s32.totalorder %s99, %s100
      %p114 = scmp.eq.s32.totalorder %s29, 1
      %p115 = por %p113, %p114
      %p117 = scmp.ne.s32.totalorder %s100, %s116
      %p118 = scmp.eq.s32.totalorder %s29, 0
      %p119 = por %p117, %p118
      %s120 = ssub.s32 %s23, %s30
      %p121 = scmp.eq.s32.totalorder %s120, 0
      %s123 = sadd.s32 %s122, 1
      %s124 = scalar_select %p121, %s122, %s123
      %p127 = pneg %p121
      %p128 = scmp.eq.s32.totalorder %s23, 1
      %p129 = por %p127, %p128
      %p130 = scmp.ne.s32.totalorder %s122, %s125
      %p131 = scmp.eq.s32.totalorder %s23, 0
      %p132 = por %p130, %p131
      %p133 = scmp.ne.s32.totalorder %s122, %s125
      %p134 = scmp.eq.s32.totalorder %s28, 1
      %p135 = por %p133, %p134
      %p136 = scmp.ne.s32.totalorder %s125, %s126
      %p137 = scmp.eq.s32.totalorder %s28, 0
      %p138 = por %p136, %p137
      %p139 = scmp.ne.s32.totalorder %s125, %s126
      %p140 = scmp.eq.s32.totalorder %s29, 1
      %p141 = por %p139, %p140
      %p143 = scmp.ne.s32.totalorder %s126, %s142
      %p144 = scmp.eq.s32.totalorder %s29, 0
      %p145 = por %p143, %p144
      %s146 = ssub.s32 %s23, %s30
      %p147 = scmp.eq.s32.totalorder %s146, 0
      %s149 = sadd.s32 %s148, 1
      %s150 = scalar_select %p147, %s148, %s149
      %p153 = pneg %p147
      %p154 = scmp.eq.s32.totalorder %s23, 1
      %p155 = por %p153, %p154
      %p156 = scmp.ne.s32.totalorder %s148, %s151
      %p157 = scmp.eq.s32.totalorder %s23, 0
      %p158 = por %p156, %p157
      %p159 = scmp.ne.s32.totalorder %s148, %s151
      %p160 = scmp.eq.s32.totalorder %s28, 1
      %p161 = por %p159, %p160
      %p162 = scmp.ne.s32.totalorder %s151, %s152
      %p163 = scmp.eq.s32.totalorder %s28, 0
      %p164 = por %p162, %p163
      %p165 = scmp.ne.s32.totalorder %s151, %s152
      %p166 = scmp.eq.s32.totalorder %s29, 1
      %p167 = por %p165, %p166
      %p169 = scmp.ne.s32.totalorder %s152, %s168
      %p170 = scmp.eq.s32.totalorder %s29, 0
      %p171 = por %p169, %p170
      %s172 = ssub.s32 %s23, %s30
      %p173 = scmp.eq.s32.totalorder %s172, 0
      %s175 = sadd.s32 %s174, 1
      %s176 = scalar_select %p173, %s174, %s175
      %p179 = pneg %p173
      %p180 = scmp.eq.s32.totalorder %s23, 1
      %p181 = por %p179, %p180
      %p182 = scmp.ne.s32.totalorder %s174, %s177
      %p183 = scmp.eq.s32.totalorder %s23, 0
      %p184 = por %p182, %p183
      %p185 = scmp.ne.s32.totalorder %s174, %s177
      %p186 = scmp.eq.s32.totalorder %s28, 1
      %p187 = por %p185, %p186
      %p188 = scmp.ne.s32.totalorder %s177, %s178
      %p189 = scmp.eq.s32.totalorder %s28, 0
      %p190 = por %p188, %p189
      %p191 = scmp.ne.s32.totalorder %s177, %s178
      %p192 = scmp.eq.s32.totalorder %s29, 1
      %p193 = por %p191, %p192
      %p195 = scmp.ne.s32.totalorder %s178, %s194
      %p196 = scmp.eq.s32.totalorder %s29, 0
      %p197 = por %p195, %p196
      %s198 = ssub.s32 %s23, %s30
      %p199 = scmp.eq.s32.totalorder %s198, 0
      %s201 = sadd.s32 %s200, 1
      %s202 = scalar_select %p199, %s200, %s201
      %p205 = pneg %p199
      %p206 = scmp.eq.s32.totalorder %s23, 1
      %p207 = por %p205, %p206
      %p208 = scmp.ne.s32.totalorder %s200, %s203
      %p209 = scmp.eq.s32.totalorder %s23, 0
      %p210 = por %p208, %p209
      %p211 = scmp.ne.s32.totalorder %s200, %s203
      %p212 = scmp.eq.s32.totalorder %s28, 1
      %p213 = por %p211, %p212
      %p214 = scmp.ne.s32.totalorder %s203, %s204
      %p215 = scmp.eq.s32.totalorder %s28, 0
      %p216 = por %p214, %p215
      %p217 = scmp.ne.s32.totalorder %s203, %s204
      %p218 = scmp.eq.s32.totalorder %s29, 1
      %p219 = por %p217, %p218
      %p221 = scmp.ne.s32.totalorder %s204, %s220
      %p222 = scmp.eq.s32.totalorder %s29, 0
      %p223 = por %p221, %p222
      %s225 = sadd.s32 %s224, 1
      %p228 = scmp.eq.s32.totalorder %s23, 1
      %p229 = scmp.ne.s32.totalorder %s224, %s226
      %p230 = scmp.eq.s32.totalorder %s23, 0
      %p231 = por %p229, %p230
      %p232 = scmp.ne.s32.totalorder %s224, %s226
      %p233 = scmp.eq.s32.totalorder %s28, 1
      %p234 = por %p232, %p233
      %p235 = scmp.ne.s32.totalorder %s226, %s227
      %p236 = scmp.eq.s32.totalorder %s28, 0
      %p237 = por %p235, %p236
      %p238 = scmp.ne.s32.totalorder %s226, %s227
      %p239 = scmp.eq.s32.totalorder %s29, 1
      %p240 = por %p238, %p239
      %p242 = scmp.ne.s32.totalorder %s227, %s241
      %p243 = scmp.eq.s32.totalorder %s29, 0
      %p244 = por %p242, %p243
      %s246 = sadd.s32 %s245, 1
      %p249 = scmp.eq.s32.totalorder %s23, 1
      %p250 = scmp.ne.s32.totalorder %s245, %s247
      %p251 = scmp.eq.s32.totalorder %s23, 0
      %p252 = por %p250, %p251
      %p253 = scmp.ne.s32.totalorder %s245, %s247
      %p254 = scmp.eq.s32.totalorder %s28, 1
      %p255 = por %p253, %p254
      %p256 = scmp.ne.s32.totalorder %s247, %s248
      %p257 = scmp.eq.s32.totalorder %s28, 0
      %p258 = por %p256, %p257
      %p259 = scmp.ne.s32.totalorder %s247, %s248
      %p260 = scmp.eq.s32.totalorder %s29, 1
      %p261 = por %p259, %p260
      %p263 = scmp.ne.s32.totalorder %s248, %s262
      %p264 = scmp.eq.s32.totalorder %s29, 0
      %p265 = por %p263, %p264
      %s267 = sadd.s32 %s266, 1
      %p270 = scmp.eq.s32.totalorder %s23, 1
      %p271 = scmp.ne.s32.totalorder %s266, %s268
      %p272 = scmp.eq.s32.totalorder %s23, 0
      %p273 = por %p271, %p272
      %p274 = scmp.ne.s32.totalorder %s266, %s268
      %p275 = scmp.eq.s32.totalorder %s28, 1
      %p276 = por %p274, %p275
      %p277 = scmp.ne.s32.totalorder %s268, %s269
      %p278 = scmp.eq.s32.totalorder %s28, 0
      %p279 = por %p277, %p278
      %p280 = scmp.ne.s32.totalorder %s268, %s269
      %p281 = scmp.eq.s32.totalorder %s29, 1
      %p282 = por %p280, %p281
      %p284 = scmp.ne.s32.totalorder %s269, %s283
      %p285 = scmp.eq.s32.totalorder %s29, 0
      %p286 = por %p284, %p285
      %s288 = sadd.s32 %s287, 1
      %p291 = scmp.eq.s32.totalorder %s23, 1
      %p292 = scmp.ne.s32.totalorder %s287, %s289
      %p293 = scmp.eq.s32.totalorder %s23, 0
      %p294 = por %p292, %p293
      %p295 = scmp.ne.s32.totalorder %s287, %s289
      %p296 = scmp.eq.s32.totalorder %s28, 1
      %p297 = por %p295, %p296
      %p298 = scmp.ne.s32.totalorder %s289, %s290
      %p299 = scmp.eq.s32.totalorder %s28, 0
      %p300 = por %p298, %p299
      %p301 = scmp.ne.s32.totalorder %s289, %s290
      %p302 = scmp.eq.s32.totalorder %s29, 1
      %p303 = por %p301, %p302
      %p305 = scmp.ne.s32.totalorder %s290, %s304
      %p306 = scmp.eq.s32.totalorder %s29, 0
      %p307 = por %p305, %p306
      %s309 = sadd.s32 %s308, 1
      %p312 = scmp.eq.s32.totalorder %s23, 1
      %p313 = scmp.ne.s32.totalorder %s308, %s310
      %p314 = scmp.eq.s32.totalorder %s23, 0
      %p315 = por %p313, %p314
      %p316 = scmp.ne.s32.totalorder %s308, %s310
      %p317 = scmp.eq.s32.totalorder %s28, 1
      %p318 = por %p316, %p317
      %p319 = scmp.ne.s32.totalorder %s310, %s311
      %p320 = scmp.eq.s32.totalorder %s28, 0
      %p321 = por %p319, %p320
      %p322 = scmp.ne.s32.totalorder %s310, %s311
      %p323 = scmp.eq.s32.totalorder %s29, 1
      %p324 = por %p322, %p323
      %p326 = scmp.ne.s32.totalorder %s311, %s325
      %p327 = scmp.eq.s32.totalorder %s29, 0
      %p328 = por %p326, %p327
      %s330 = sadd.s32 %s329, 1
      %p333 = scmp.eq.s32.totalorder %s23, 1
      %p334 = scmp.ne.s32.totalorder %s329, %s331
      %p335 = scmp.eq.s32.totalorder %s23, 0
      %p336 = por %p334, %p335
      %p337 = scmp.ne.s32.totalorder %s329, %s331
      %p338 = scmp.eq.s32.totalorder %s28, 1
      %p339 = por %p337, %p338
      %p340 = scmp.ne.s32.totalorder %s331, %s332
      %p341 = scmp.eq.s32.totalorder %s28, 0
      %p342 = por %p340, %p341
      %p343 = scmp.ne.s32.totalorder %s331, %s332
      %p344 = scmp.eq.s32.totalorder %s29, 1
      %p345 = por %p343, %p344
      %p347 = scmp.ne.s32.totalorder %s332, %s346
      %p348 = scmp.eq.s32.totalorder %s29, 0
      %p349 = por %p347, %p348
      %s351 = sadd.s32 %s350, 1
      %p354 = scmp.eq.s32.totalorder %s23, 1
      %p355 = scmp.ne.s32.totalorder %s350, %s352
      %p356 = scmp.eq.s32.totalorder %s23, 0
      %p357 = por %p355, %p356
      %p358 = scmp.ne.s32.totalorder %s350, %s352
      %p359 = scmp.eq.s32.totalorder %s28, 1
      %p360 = por %p358, %p359
      %p361 = scmp.ne.s32.totalorder %s352, %s353
      %p362 = scmp.eq.s32.totalorder %s28, 0
      %p363 = por %p361, %p362
      %p364 = scmp.ne.s32.totalorder %s352, %s353
      %p365 = scmp.eq.s32.totalorder %s29, 1
      %p366 = por %p364, %p365
      %p368 = scmp.ne.s32.totalorder %s353, %s367
      %p369 = scmp.eq.s32.totalorder %s29, 0
      %p370 = por %p368, %p369
      %p371 = scmp.le.s32.totalorder 1, %s23
      %p372 = scmp.lt.s32.totalorder %s23, 3
      %p373 = pnand %p371, %p372
      %p374 = pneg %p373
      // Predicated region
      $region9: #{action_bert_forward.1} parent=5 // pred_check
        _
      $region10: #{action_bert_forward.1} parent=5 // pred_check_branch
        %376 = sbr.rel (%p373) target = $region12
      $region11: #{action_bert_forward.1} parent=5 // pred_region
        %s377 = ssub.s32 %s23, 1
        // Predicated region
        $region13: #{action_bert_forward.1} parent=11 // pred_check
          %p378 = pneg %p44
        $region14: #{action_bert_forward.1} parent=11 // pred_check_branch
          %380 = sbr.rel (%p378) target = $region16
        $region15: #{action_bert_forward.1} parent=11 // pred_region
          _
        $region16: #{action_bert_forward.1} parent=11 // pred_fallthru
          _
        // Predicated region
        $region17: #{action_bert_forward.1} parent=11 // pred_check
          %p381 = pneg %p65
        $region18: #{action_bert_forward.1} parent=11 // pred_check_branch
          %383 = sbr.rel (%p381) target = $region20
        $region19: #{action_bert_forward.1} parent=11 // pred_region
          _
        $region20: #{action_bert_forward.1} parent=11 // pred_fallthru
          _
        // Predicated region
        $region21: #{action_bert_forward.1} parent=11 // pred_check
          %p384 = pneg %p86
        $region22: #{action_bert_forward.1} parent=11 // pred_check_branch
          %386 = sbr.rel (%p384) target = $region24
        $region23: #{action_bert_forward.1} parent=11 // pred_region
          _
        $region24: #{action_bert_forward.1} parent=11 // pred_fallthru
          _
        // Predicated region
        $region25: #{action_bert_forward.1} parent=11 // pred_check
          %p387 = pneg %p237
        $region26: #{action_bert_forward.1} parent=11 // pred_check_branch
          %389 = sbr.rel (%p387) target = $region28
        $region27: #{action_bert_forward.1} parent=11 // pred_region
          _
        $region28: #{action_bert_forward.1} parent=11 // pred_fallthru
          _
        // Predicated region
        $region29: #{action_bert_forward.1} parent=11 // pred_check
          %p390 = pneg %p258
        $region30: #{action_bert_forward.1} parent=11 // pred_check_branch
          %392 = sbr.rel (%p390) target = $region32
        $region31: #{action_bert_forward.1} parent=11 // pred_region
          _
        $region32: #{action_bert_forward.1} parent=11 // pred_fallthru
          _
        // Predicated region
        $region33: #{action_bert_forward.1} parent=11 // pred_check
          %p393 = pneg %p279
        $region34: #{action_bert_forward.1} parent=11 // pred_check_branch
          %395 = sbr.rel (%p393) target = $region36
        $region35: #{action_bert_forward.1} parent=11 // pred_region
          _
        $region36: #{action_bert_forward.1} parent=11 // pred_fallthru
          _
        // Predicated region
        $region37: #{action_bert_forward.1} parent=11 // pred_check
          %p396 = pneg %p300
        $region38: #{action_bert_forward.1} parent=11 // pred_check_branch
          %398 = sbr.rel (%p396) target = $region40
        $region39: #{action_bert_forward.1} parent=11 // pred_region
          _
        $region40: #{action_bert_forward.1} parent=11 // pred_fallthru
          _
        // Predicated region
        $region41: #{action_bert_forward.1} parent=11 // pred_check
          %p399 = pneg %p321
        $region42: #{action_bert_forward.1} parent=11 // pred_check_branch
          %401 = sbr.rel (%p399) target = $region44
        $region43: #{action_bert_forward.1} parent=11 // pred_region
          _
        $region44: #{action_bert_forward.1} parent=11 // pred_fallthru
          _
      $region12: #{action_bert_forward.1} parent=5 // pred_fallthru
        _
      %p402 = scmp.lt.s32.totalorder %s23, 2
      // Predicated region
      $region45: #{action_bert_forward.1} parent=5 // pred_check
        %p403 = pneg %p402
      $region46: #{action_bert_forward.1} parent=5 // pred_check_branch
        %405 = sbr.rel (%p403) target = $region48
      $region47: #{action_bert_forward.1} parent=5 // pred_region
        // Predicated region
        $region49: #{action_bert_forward.1} parent=47 // pred_check
          %p406 = pneg %p106
        $region50: #{action_bert_forward.1} parent=47 // pred_check_branch
          %408 = sbr.rel (%p406) target = $region52
        $region51: #{action_bert_forward.1} parent=47 // pred_region
          %p409 = scmp.lt.s32.totalorder %s23, 1
          %s410 = scalar_select %p409, %s23, 1
          %s411 = smul.addr %s410, 4
          %s412 = smul.addr %s411, 4
          %s413 = scalar_lea.vmem %s3, %s412
        $region52: #{action_bert_forward.1} parent=47 // pred_fallthru
          _
        // Predicated region
        $region53: #{action_bert_forward.1} parent=47 // pred_check
          %p414 = pneg %p132
        $region54: #{action_bert_forward.1} parent=47 // pred_check_branch
          %416 = sbr.rel (%p414) target = $region56
        $region55: #{action_bert_forward.1} parent=47 // pred_region
          %p417 = scmp.lt.s32.totalorder %s23, 1
          %s418 = scalar_select %p417, %s23, 1
          %s419 = smul.addr %s418, 4
          %s420 = smul.addr %s419, 4
          %s421 = scalar_lea.vmem %s4, %s420
        $region56: #{action_bert_forward.1} parent=47 // pred_fallthru
          _
        // Predicated region
        $region57: #{action_bert_forward.1} parent=47 // pred_check
          %p422 = pneg %p158
        $region58: #{action_bert_forward.1} parent=47 // pred_check_branch
          %424 = sbr.rel (%p422) target = $region60
        $region59: #{action_bert_forward.1} parent=47 // pred_region
          %p425 = scmp.lt.s32.totalorder %s23, 1
          %s426 = scalar_select %p425, %s23, 1
          %s427 = smul.addr %s426, 4
          %s428 = smul.addr %s427, 4
          %s429 = scalar_lea.vmem %s5, %s428
        $region60: #{action_bert_forward.1} parent=47 // pred_fallthru
          _
        // Predicated region
        $region61: #{action_bert_forward.1} parent=47 // pred_check
          %p430 = pneg %p184
        $region62: #{action_bert_forward.1} parent=47 // pred_check_branch
          %432 = sbr.rel (%p430) target = $region64
        $region63: #{action_bert_forward.1} parent=47 // pred_region
          %p433 = scmp.lt.s32.totalorder %s23, 1
          %s434 = scalar_select %p433, %s23, 1
          %s435 = smul.addr %s434, 8
          %s436 = smul.addr %s435, 4
          %s437 = scalar_lea.vmem %s6, %s436
        $region64: #{action_bert_forward.1} parent=47 // pred_fallthru
          _
        // Predicated region
        $region65: #{action_bert_forward.1} parent=47 // pred_check
          %p438 = pneg %p210
        $region66: #{action_bert_forward.1} parent=47 // pred_check_branch
          %440 = sbr.rel (%p438) target = $region68
        $region67: #{action_bert_forward.1} parent=47 // pred_region
          %p441 = scmp.lt.s32.totalorder %s23, 1
          %s442 = scalar_select %p441, %s23, 1
          %s443 = smul.addr %s442, 4
          %s444 = scalar_lea.vmem %s7, %s443
        $region68: #{action_bert_forward.1} parent=47 // pred_fallthru
          _
      $region48: #{action_bert_forward.1} parent=5 // pred_fallthru
        _
      %p445 = scmp.le.s32.totalorder 1, %s23
      %p446 = scmp.lt.s32.totalorder %s23, 3
      %p447 = pnand %p445, %p446
      %p448 = pneg %p447
      // Predicated region
      $region69: #{action_bert_forward.1} parent=5 // pred_check
        _
      $region70: #{action_bert_forward.1} parent=5 // pred_check_branch
        %450 = sbr.rel (%p447) target = $region72
      $region71: #{action_bert_forward.1} parent=5 // pred_region
        %s451 = ssub.s32 %s23, 1
        %p452 = pneg %p44
        %p453 = pneg %p41
        %p454 = pneg %p65
        %p455 = pneg %p62
        %p456 = pneg %p86
        %p457 = pneg %p83
        %p458 = scmp.lt.s32.totalorder %s28, 1
        %s459 = scalar_select %p458, %s28, 1
        %s460 = smul.addr %s459, 4
        %s461 = smul.addr %s460, 4
        %s462 = scalar_lea.vmem %s3, %s461
        %p463 = pneg %p112
        %p464 = pneg %p109
        %p465 = scmp.lt.s32.totalorder %s28, 1
        %s466 = scalar_select %p465, %s28, 1
        %s467 = smul.addr %s466, 4
        %s468 = smul.addr %s467, 4
        %s469 = scalar_lea.vmem %s4, %s468
        %p470 = pneg %p138
        %p471 = pneg %p135
        %p472 = scmp.lt.s32.totalorder %s28, 1
        %s473 = scalar_select %p472, %s28, 1
        %s474 = smul.addr %s473, 4
        %s475 = smul.addr %s474, 4
        %s476 = scalar_lea.vmem %s5, %s475
        %p477 = pneg %p164
        %p478 = pneg %p161
        %p479 = scmp.lt.s32.totalorder %s28, 1
        %s480 = scalar_select %p479, %s28, 1
        %s481 = smul.addr %s480, 8
        %s482 = smul.addr %s481, 4
        %s483 = scalar_lea.vmem %s6, %s482
        %p484 = pneg %p190
        %p485 = pneg %p187
        %p486 = scmp.lt.s32.totalorder %s28, 1
        %s487 = scalar_select %p486, %s28, 1
        %s488 = smul.addr %s487, 4
        %s489 = scalar_lea.vmem %s7, %s488
        %p490 = pneg %p216
        %p491 = pneg %p213
        %p492 = pneg %p237
        %p493 = pneg %p234
        %p494 = pneg %p258
        %p495 = pneg %p255
        %p496 = pneg %p279
        %p497 = pneg %p276
        %p498 = pneg %p300
        %p499 = pneg %p297
        %p500 = pneg %p321
        %p501 = pneg %p318
        %p502 = pneg %p342
        %p503 = pneg %p339
        %p504 = pneg %p363
        %p505 = pneg %p360
        %p506 = scmp.lt.s32.totalorder %s28, 1
        %s507 = scalar_select %p506, %s28, 1
        %s508 = smul.addr %s507, 4
        %s509 = smul.addr %s508, 4
        %s510 = scalar_lea.vmem %s3, %s509
        %p511 = scmp.lt.s32.totalorder %s28, 1
        %s512 = scalar_select %p511, %s28, 1
        %s513 = smul.addr %s512, 4
        %s514 = smul.addr %s513, 4
        %s515 = scalar_lea.vmem %s4, %s514
        %p516 = scmp.lt.s32.totalorder %s28, 1
        %s517 = scalar_select %p516, %s28, 1
        %s518 = smul.addr %s517, 4
        %s519 = smul.addr %s518, 4
        %s520 = scalar_lea.vmem %s5, %s519
        %p521 = scmp.lt.s32.totalorder %s28, 1
        %s522 = scalar_select %p521, %s28, 1
        %s523 = smul.addr %s522, 8
        %s524 = smul.addr %s523, 4
        %s525 = scalar_lea.vmem %s6, %s524
        %p526 = scmp.lt.s32.totalorder %s28, 1
        %s527 = scalar_select %p526, %s28, 1
        %s528 = smul.addr %s527, 4
        %s529 = scalar_lea.vmem %s7, %s528
        %p531 = scmp.eq.s32.totalorder %s28, 0
        // Predicated region
        $region73: #{action_bert_forward.1} parent=71 // pred_check
          %p532 = pneg %p531
        $region74: #{action_bert_forward.1} parent=71 // pred_check_branch
          %534 = sbr.rel (%p532) target = $region76
        $region75: #{action_bert_forward.1} parent=71 // pred_region
          %v535 = vld [vmem:[%s2] sm:$0x3]
          %v536 = vld [vmem:[%s0] sm:$0xff]
          %v537 = vld [vmem:[%s0 + $0x8] sm:$0xff]
          %vm538 = vcmask 261120
          %v539 = vsel %vm538, %v536, 0.0
          %540 = vadd.xlane.f32.xlu0 %v539
          %v541 = vpop.xlane.xlu0 %540
          %v542 = vsel %vm538, %v537, 0.0
          %543 = vadd.xlane.f32.xlu0 %v542
          %v544 = vpop.xlane.xlu0 %543
          %v545 = vrcp.pop 32.0
          %v546 = vmul.f32 %v541, %v545
          %v547 = vmul.f32 %v544, %v545
          %v548 = vsub.f32 %v536, %v546
          %v549 = vsub.f32 %v537, %v547
          %v550 = vmul.f32 %v548, %v548
          %v551 = vmul.f32 %v549, %v549
          %v552 = vsel %vm538, %v550, 0.0
          %553 = vadd.xlane.f32.xlu0 %v552
          %v554 = vpop.xlane.xlu0 %553
          %v555 = vsel %vm538, %v551, 0.0
          %556 = vadd.xlane.f32.xlu0 %v555
          %v557 = vpop.xlane.xlu0 %556
          %v558 = vmul.f32 %v554, %v545
          %v559 = vmul.f32 %v557, %v545
          %v560 = vadd.f32 %v558, 1e-12
          %v561 = vadd.f32 %v559, 1e-12
          %v562 = vrsqrt.pop %v560
          %v563 = vrsqrt.pop %v561
          %v564 = vmul.f32 %v548, %v562
          %v565 = vmul.f32 %v549, %v563
          %v566 = vlaneseq
          %v567 = vshrl.u32 %v566, 7
          %v568 = vsub.s32 0, %v567
          %v569 = vrot.slane %v535, %v568
          %v570 = vmul.f32 %v564, %v569
          %v571 = vmul.f32 %v565, %v569
          %v572 = vlaneseq
          %v573 = vshrl.u32 %v572, 7
          %v574 = vsub.s32 1, %v573
          %v575 = vrot.slane %v535, %v574
          %v576 = vadd.f32 %v570, %v575
          %v577 = vadd.f32 %v571, %v575
          %578 = vst.msk [vmem:[#allocation2] sm:$0xff] %vm538, %v576
          %579 = vst.msk [vmem:[#allocation2 + $0x8] sm:$0xff] %vm538, %v577
        $region76: #{action_bert_forward.1} parent=71 // pred_fallthru
          _
        %v580 = vld [vmem:[#allocation2] sm:$0xff]
        %v581 = vld [vmem:[#allocation2 + $0x8] sm:$0xff]
        %v582 = vld [vmem:[%s529] sm:$0xf]
        %v583 = vpack.c.bf16 %v581, %v580
        %v584 = vld [vmem:[%s510] sm:$0xf]
        %v585 = vld [vmem:[%s510 + $0x4] sm:$0xf]
        %v586 = vld [vmem:[%s510 + $0x8] sm:$0xf]
        %v587 = vld [vmem:[%s510 + $0xc] sm:$0xf]
        %v588 = vlaneseq
        %v589 = vshrl.u32 %v588, 7
        %v590 = vsub.s32 0, %v589
        %v591 = vrot.slane %v582, %v590
        %v596 = vunpack.c.l.b16 %v584
        %v597 = vunpack.c.l.b16 %v585
        %v598 = vunpack.c.l.b16 %v586
        %v599 = vunpack.c.l.b16 %v587
        %v600 = vpack.c.b16 %v597, %v596
        %v601 = vpack.c.b16 %v599, %v598
        %vm604 = vcmask 261120
        %v606 = vsel %vm604, %v583, 0
        %608 = vmatprep.subr.bf16.mxu0 0
        %609 = vmatpush1.bf16.msra.mxu0 %v600
        %610 = vmatprep.subr.bf16.mxu0 0
        %611 = vmatpush1.bf16.msra.mxu0 %v601
        %612 = vmatprep.subr.bf16.mxu0 0
        %613 = vmatpush1.bf16.msra.mxu0 0
        %614 = vmatprep.subr.bf16.mxu0 0
        %615 = vmatpush1.bf16.msra.mxu0 0
        %616 = vmatprep.subr.bf16.mxu0 0
        %617 = vmatpush1.bf16.msra.mxu0 0
        %618 = vmatprep.subr.bf16.mxu0 0
        %619 = vmatpush1.bf16.msra.mxu0 0
        %620 = vmatprep.subr.bf16.mxu0 0
        %621 = vmatpush1.bf16.msra.mxu0 0
        %622 = vmatprep.subr.bf16.mxu0 0
        %623 = vmatpush1.bf16.msra.mxu0 0
        %624 = vmatprep.subr.bf16.mxu0 0
        %625 = vmatpush1.bf16.msra.mxu0 0
        %626 = vmatprep.subr.bf16.mxu0 0
        %627 = vmatpush1.bf16.msra.mxu0 0
        %628 = vmatprep.subr.bf16.mxu0 0
        %629 = vmatpush1.bf16.msra.mxu0 0
        %630 = vmatprep.subr.bf16.mxu0 0
        %631 = vmatpush1.bf16.msra.mxu0 0
        %632 = vmatprep.subr.bf16.mxu0 0
        %633 = vmatpush1.bf16.msra.mxu0 0
        %634 = vmatprep.subr.bf16.mxu0 0
        %635 = vmatpush1.bf16.msra.mxu0 0
        %636 = vmatprep.subr.bf16.mxu0 0
        %637 = vmatpush1.bf16.msra.mxu0 0
        %638 = vmatprep.subr.bf16.mxu0 0
        %639 = vmatpush1.bf16.msra.mxu0 0
        %640 = vmatprep.mubr.bf16.mxu0 0
        %641 = vmatmul.mubr.bf16.gmra.mrb[0].mxu0 %v606
        %v642 = vpop.f32.mrb[0].mxu0
        %v643 = vadd.f32 %v591, %v642
        %v644 = vpop.f32.mrb[0].mxu0
        %v645 = vpop.f32.mrb[0].mxu0
        %v646 = vadd.f32 %v591, %v645
        %v647 = vpop.f32.mrb[0].mxu0
        %648 = vdwg.mxu0
        %651 = vrot.lane.b32.xlu0 %v643, 120
        %v652 = vpop.permute.xlu0 %651
        %653 = vrot.lane.b32.xlu0 %v646, 120
        %v654 = vpop.permute.xlu0 %653
        %657 = vrot.lane.b32.xlu0 %v643, 112
        %v658 = vpop.permute.xlu0 %657
        %659 = vrot.lane.b32.xlu0 %v646, 112
        %v660 = vpop.permute.xlu0 %659
        %663 = vrot.lane.b32.xlu0 %v643, 104
        %v664 = vpop.permute.xlu0 %663
        %665 = vrot.lane.b32.xlu0 %v646, 104
        %v666 = vpop.permute.xlu0 %665
        %v669 = vld [vmem:[%s1] sm:$0x3]
        %v670 = vpack.c.bf16 %v643, %v643
        %v671 = vpack.c.bf16 %v652, %v652
        %v672 = vpack.c.bf16 %v658, %v658
        %v673 = vpack.c.bf16 %v664, %v664
        %vm674 = vcmp.gt.f32.partialorder %v669, 0.5
        %v675 = vsel %vm674, 0.0, -1e+09
        %677 = vrot.lane.b32.xlu0 %v670, 96
        %v678 = vpop.permute.xlu0 %677
        %vm679 = vcmask 64512
        %v681 = vsel %vm679, %v670, 0
        %v684 = vsel %vm679, %v678, 0
        %686 = vmatprep.subr.bf16.mxu0 0
        %687 = vmatpush1.bf16.xpose.msra.mxu0 %v684
        %688 = vmatprep.subr.bf16.mxu0 0
        %689 = vmatpush1.bf16.xpose.msra.mxu0 0
        %690 = vmatprep.subr.bf16.mxu0 0
        %691 = vmatpush1.bf16.xpose.msra.mxu0 0
        %692 = vmatprep.subr.bf16.mxu0 0
        %693 = vmatpush1.bf16.xpose.msra.mxu0 0
        %694 = vmatprep.subr.bf16.mxu0 0
        %695 = vmatpush1.bf16.xpose.msra.mxu0 0
        %696 = vmatprep.subr.bf16.mxu0 0
        %697 = vmatpush1.bf16.xpose.msra.mxu0 0
        %698 = vmatprep.subr.bf16.mxu0 0
        %699 = vmatpush1.bf16.xpose.msra.mxu0 0
        %700 = vmatprep.subr.bf16.mxu0 0
        %701 = vmatpush1.bf16.xpose.msra.mxu0 0
        %702 = vmatprep.subr.bf16.mxu0 0
        %703 = vmatpush1.bf16.xpose.msra.mxu0 0
        %704 = vmatprep.subr.bf16.mxu0 0
        %705 = vmatpush1.bf16.xpose.msra.mxu0 0
        %706 = vmatprep.subr.bf16.mxu0 0
        %707 = vmatpush1.bf16.xpose.msra.mxu0 0
        %708 = vmatprep.subr.bf16.mxu0 0
        %709 = vmatpush1.bf16.xpose.msra.mxu0 0
        %710 = vmatprep.subr.bf16.mxu0 0
        %711 = vmatpush1.bf16.xpose.msra.mxu0 0
        %712 = vmatprep.subr.bf16.mxu0 0
        %713 = vmatpush1.bf16.xpose.msra.mxu0 0
        %714 = vmatprep.subr.bf16.mxu0 0
        %715 = vmatpush1.bf16.xpose.msra.mxu0 0
        %716 = vmatprep.subr.bf16.mxu0 0
        %717 = vmatpush1.bf16.xpose.msra.mxu0 0
        %718 = vmatprep.mubr.bf16.mxu0 0
        %719 = vmatmul.mubr.bf16.gmra.mrb[0].mxu0 %v681
        %v720 = vpop.f32.mrb[0].mxu0
        %v721 = vadd.f32 0.0, %v720
        %v722 = vpop.f32.mrb[0].mxu0
        %v723 = vpop.f32.mrb[0].mxu0
        %v724 = vpop.f32.mrb[0].mxu0
        %725 = vdwg.mxu0
        %727 = vrot.lane.b32.xlu0 %v671, 96
        %v728 = vpop.permute.xlu0 %727
        %v730 = vsel %vm679, %v671, 0
        %v733 = vsel %vm679, %v728, 0
        %735 = vmatprep.subr.bf16.mxu0 0
        %736 = vmatpush1.bf16.xpose.msra.mxu0 %v733
        %737 = vmatprep.subr.bf16.mxu0 0
        %738 = vmatpush1.bf16.xpose.msra.mxu0 0
        %739 = vmatprep.subr.bf16.mxu0 0
        %740 = vmatpush1.bf16.xpose.msra.mxu0 0
        %741 = vmatprep.subr.bf16.mxu0 0
        %742 = vmatpush1.bf16.xpose.msra.mxu0 0
        %743 = vmatprep.subr.bf16.mxu0 0
        %744 = vmatpush1.bf16.xpose.msra.mxu0 0
        %745 = vmatprep.subr.bf16.mxu0 0
        %746 = vmatpush1.bf16.xpose.msra.mxu0 0
        %747 = vmatprep.subr.bf16.mxu0 0
        %748 = vmatpush1.bf16.xpose.msra.mxu0 0
        %749 = vmatprep.subr.bf16.mxu0 0
        %750 = vmatpush1.bf16.xpose.msra.mxu0 0
        %751 = vmatprep.subr.bf16.mxu0 0
        %752 = vmatpush1.bf16.xpose.msra.mxu0 0
        %753 = vmatprep.subr.bf16.mxu0 0
        %754 = vmatpush1.bf16.xpose.msra.mxu0 0
        %755 = vmatprep.subr.bf16.mxu0 0
        %756 = vmatpush1.bf16.xpose.msra.mxu0 0
        %757 = vmatprep.subr.bf16.mxu0 0
        %758 = vmatpush1.bf16.xpose.msra.mxu0 0
        %759 = vmatprep.subr.bf16.mxu0 0
        %760 = vmatpush1.bf16.xpose.msra.mxu0 0
        %761 = vmatprep.subr.bf16.mxu0 0
        %762 = vmatpush1.bf16.xpose.msra.mxu0 0
        %763 = vmatprep.subr.bf16.mxu0 0
        %764 = vmatpush1.bf16.xpose.msra.mxu0 0
        %765 = vmatprep.subr.bf16.mxu0 0
        %766 = vmatpush1.bf16.xpose.msra.mxu0 0
        %767 = vmatprep.mubr.bf16.mxu0 0
        %768 = vmatmul.mubr.bf16.gmra.mrb[0].mxu0 %v730
        %v769 = vpop.f32.mrb[0].mxu0
        %v770 = vadd.f32 0.0, %v769
        %v771 = vpop.f32.mrb[0].mxu0
        %v772 = vpop.f32.mrb[0].mxu0
        %v773 = vpop.f32.mrb[0].mxu0
        %774 = vdwg.mxu0
        %776 = vrot.lane.b32.xlu0 %v672, 96
        %v777 = vpop.permute.xlu0 %776
        %v779 = vsel %vm679, %v672, 0
        %v782 = vsel %vm679, %v777, 0
        %784 = vmatprep.subr.bf16.mxu0 0
        %785 = vmatpush1.bf16.xpose.msra.mxu0 %v782
        %786 = vmatprep.subr.bf16.mxu0 0
        %787 = vmatpush1.bf16.xpose.msra.mxu0 0
        %788 = vmatprep.subr.bf16.mxu0 0
        %789 = vmatpush1.bf16.xpose.msra.mxu0 0
        %790 = vmatprep.subr.bf16.mxu0 0
        %791 = vmatpush1.bf16.xpose.msra.mxu0 0
        %792 = vmatprep.subr.bf16.mxu0 0
        %793 = vmatpush1.bf16.xpose.msra.mxu0 0
        %794 = vmatprep.subr.bf16.mxu0 0
        %795 = vmatpush1.bf16.xpose.msra.mxu0 0
        %796 = vmatprep.subr.bf16.mxu0 0
        %797 = vmatpush1.bf16.xpose.msra.mxu0 0
        %798 = vmatprep.subr.bf16.mxu0 0
        %799 = vmatpush1.bf16.xpose.msra.mxu0 0
        %800 = vmatprep.subr.bf16.mxu0 0
        %801 = vmatpush1.bf16.xpose.msra.mxu0 0
        %802 = vmatprep.subr.bf16.mxu0 0
        %803 = vmatpush1.bf16.xpose.msra.mxu0 0
        %804 = vmatprep.subr.bf16.mxu0 0
        %805 = vmatpush1.bf16.xpose.msra.mxu0 0
        %806 = vmatprep.subr.bf16.mxu0 0
        %807 = vmatpush1.bf16.xpose.msra.mxu0 0
        %808 = vmatprep.subr.bf16.mxu0 0
        %809 = vmatpush1.bf16.xpose.msra.mxu0 0
        %810 = vmatprep.subr.bf16.mxu0 0
        %811 = vmatpush1.bf16.xpose.msra.mxu0 0
        %812 = vmatprep.subr.bf16.mxu0 0
        %813 = vmatpush1.bf16.xpose.msra.mxu0 0
        %814 = vmatprep.subr.bf16.mxu0 0
        %815 = vmatpush1.bf16.xpose.msra.mxu0 0
        %816 = vmatprep.mubr.bf16.mxu0 0
        %817 = vmatmul.mubr.bf16.gmra.mrb[0].mxu0 %v779
        %v818 = vpop.f32.mrb[0].mxu0
        %v819 = vadd.f32 0.0, %v818
        %v820 = vpop.f32.mrb[0].mxu0
        %v821 = vpop.f32.mrb[0].mxu0
        %v822 = vpop.f32.mrb[0].mxu0
        %823 = vdwg.mxu0
        %825 = vrot.lane.b32.xlu0 %v673, 96
        %v826 = vpop.permute.xlu0 %825
        %v828 = vsel %vm679, %v673, 0
        %v831 = vsel %vm679, %v826, 0
        %833 = vmatprep.subr.bf16.mxu0 0
        %834 = vmatpush1.bf16.xpose.msra.mxu0 %v831
        %835 = vmatprep.subr.bf16.mxu0 0
        %836 = vmatpush1.bf16.xpose.msra.mxu0 0
        %837 = vmatprep.subr.bf16.mxu0 0
        %838 = vmatpush1.bf16.xpose.msra.mxu0 0
        %839 = vmatprep.subr.bf16.mxu0 0
        %840 = vmatpush1.bf16.xpose.msra.mxu0 0
        %841 = vmatprep.subr.bf16.mxu0 0
        %842 = vmatpush1.bf16.xpose.msra.mxu0 0
        %843 = vmatprep.subr.bf16.mxu0 0
        %844 = vmatpush1.bf16.xpose.msra.mxu0 0
        %845 = vmatprep.subr.bf16.mxu0 0
        %846 = vmatpush1.bf16.xpose.msra.mxu0 0
        %847 = vmatprep.subr.bf16.mxu0 0
        %848 = vmatpush1.bf16.xpose.msra.mxu0 0
        %849 = vmatprep.subr.bf16.mxu0 0
        %850 = vmatpush1.bf16.xpose.msra.mxu0 0
        %851 = vmatprep.subr.bf16.mxu0 0
        %852 = vmatpush1.bf16.xpose.msra.mxu0 0
        %853 = vmatprep.subr.bf16.mxu0 0
        %854 = vmatpush1.bf16.xpose.msra.mxu0 0
        %855 = vmatprep.subr.bf16.mxu0 0
        %856 = vmatpush1.bf16.xpose.msra.mxu0 0
        %857 = vmatprep.subr.bf16.mxu0 0
        %858 = vmatpush1.bf16.xpose.msra.mxu0 0
        %859 = vmatprep.subr.bf16.mxu0 0
        %860 = vmatpush1.bf16.xpose.msra.mxu0 0
        %861 = vmatprep.subr.bf16.mxu0 0
        %862 = vmatpush1.bf16.xpose.msra.mxu0 0
        %863 = vmatprep.subr.bf16.mxu0 0
        %864 = vmatpush1.bf16.xpose.msra.mxu0 0
        %865 = vmatprep.mubr.bf16.mxu0 0
        %866 = vmatmul.mubr.bf16.gmra.mrb[0].mxu0 %v828
        %v867 = vpop.f32.mrb[0].mxu0
        %v868 = vadd.f32 0.0, %v867
        %v869 = vpop.f32.mrb[0].mxu0
        %v870 = vpop.f32.mrb[0].mxu0
        %v871 = vpop.f32.mrb[0].mxu0
        %872 = vdwg.mxu0
        %v873 = vmul.f32 %v721, 0.35355338
        %v874 = vmul.f32 %v770, 0.35355338
        %v875 = vmul.f32 %v819, 0.35355338
        %v876 = vmul.f32 %v868, 0.35355338
        %v877 = vlaneseq
        %v878 = vshrl.u32 %v877, 7
        %v879 = vsub.s32 0, %v878
        %v880 = vrot.slane %v675, %v879
        %v881 = vadd.f32 %v873, %v880
        %v882 = vadd.f32 %v874, %v880
        %v883 = vadd.f32 %v875, %v880
        %v884 = vadd.f32 %v876, %v880
        %v885 = vsel %vm679, %v881, -inf
        %886 = vmax.xlane.f32.xlu0 %v885
        %v887 = vpop.xlane.xlu0 %886
        %v888 = vsel %vm679, %v882, -inf
        %889 = vmax.xlane.f32.xlu0 %v888
        %v890 = vpop.xlane.xlu0 %889
        %v891 = vsel %vm679, %v883, -inf
        %892 = vmax.xlane.f32.xlu0 %v891
        %v893 = vpop.xlane.xlu0 %892
        %v894 = vsel %vm679, %v884, -inf
        %895 = vmax.xlane.f32.xlu0 %v894
        %v896 = vpop.xlane.xlu0 %895
        %v897 = vsub.f32 %v881, %v887
        %v898 = vsub.f32 %v882, %v890
        %v899 = vsub.f32 %v883, %v893
        %v900 = vsub.f32 %v884, %v896
        %v901 = vmul.f32 %v897, 1.442695
        %v902 = vpow.pop %v901
        %v903 = vmul.f32 %v898, 1.442695
        %v904 = vpow.pop %v903
        %v905 = vmul.f32 %v899, 1.442695
        %v906 = vpow.pop %v905
        %v907 = vmul.f32 %v900, 1.442695
        %v908 = vpow.pop %v907
        %v909 = vsel %vm679, %v902, 0.0
        %910 = vadd.xlane.f32.xlu0 %v909
        %v911 = vpop.xlane.xlu0 %910
        %v912 = vsel %vm679, %v904, 0.0
        %913 = vadd.xlane.f32.xlu0 %v912
        %v914 = vpop.xlane.xlu0 %913
        %v915 = vsel %vm679, %v906, 0.0
        %916 = vadd.xlane.f32.xlu0 %v915
        %v917 = vpop.xlane.xlu0 %916
        %v918 = vsel %vm679, %v908, 0.0
        %919 = vadd.xlane.f32.xlu0 %v918
        %v920 = vpop.xlane.xlu0 %919
        %v921 = vrcp.pop %v911
        %v922 = vrcp.pop %v914
        %v923 = vrcp.pop %v917
        %v924 = vrcp.pop %v920
        %v925 = vmul.f32 %v902, %v921
        %v926 = vmul.f32 %v904, %v922
        %v927 = vmul.f32 %v906, %v923
        %v928 = vmul.f32 %v908, %v924
        %v929 = vpack.c.bf16 %v925, %v925
        %v930 = vpack.c.bf16 %v926, %v926
        %v931 = vpack.c.bf16 %v927, %v927
        %v932 = vpack.c.bf16 %v928, %v928
        %933 = vrot.lane.b32.xlu0 %v670, 64
        %v934 = vpop.permute.xlu0 %933
        %v936 = vsel %vm679, %v929, 0
        %vm938 = vcmask 1043456
        %v940 = vsel %vm938, %v934, 0
        %942 = vmatprep.subr.bf16.mxu0 0
        %943 = vmatpush1.bf16.msra.mxu0 %v940
        %944 = vmatprep.subr.bf16.mxu0 0
        %945 = vmatpush1.bf16.msra.mxu0 0
        %946 = vmatprep.subr.bf16.mxu0 0
        %947 = vmatpush1.bf16.msra.mxu0 0
        %948 = vmatprep.subr.bf16.mxu0 0
        %949 = vmatpush1.bf16.msra.mxu0 0
        %950 = vmatprep.subr.bf16.mxu0 0
        %951 = vmatpush1.bf16.msra.mxu0 0
        %952 = vmatprep.subr.bf16.mxu0 0
        %953 = vmatpush1.bf16.msra.mxu0 0
        %954 = vmatprep.subr.bf16.mxu0 0
        %955 = vmatpush1.bf16.msra.mxu0 0
        %956 = vmatprep.subr.bf16.mxu0 0
        %957 = vmatpush1.bf16.msra.mxu0 0
        %958 = vmatprep.subr.bf16.mxu0 0
        %959 = vmatpush1.bf16.msra.mxu0 0
        %960 = vmatprep.subr.bf16.mxu0 0
        %961 = vmatpush1.bf16.msra.mxu0 0
        %962 = vmatprep.subr.bf16.mxu0 0
        %963 = vmatpush1.bf16.msra.mxu0 0
        %964 = vmatprep.subr.bf16.mxu0 0
        %965 = vmatpush1.bf16.msra.mxu0 0
        %966 = vmatprep.subr.bf16.mxu0 0
        %967 = vmatpush1.bf16.msra.mxu0 0
        %968 = vmatprep.subr.bf16.mxu0 0
        %969 = vmatpush1.bf16.msra.mxu0 0
        %970 = vmatprep.subr.bf16.mxu0 0
        %971 = vmatpush1.bf16.msra.mxu0 0
        %972 = vmatprep.subr.bf16.mxu0 0
        %973 = vmatpush1.bf16.msra.mxu0 0
        %974 = vmatprep.mubr.bf16.mxu0 0
        %975 = vmatmul.mubr.bf16.gmra.mrb[0].mxu0 %v936
        %v976 = vpop.f32.mrb[0].mxu0
        %v977 = vadd.f32 0.0, %v976
        %v978 = vpop.f32.mrb[0].mxu0
        %v979 = vpop.f32.mrb[0].mxu0
        %v980 = vpop.f32.mrb[0].mxu0
        %981 = vdwg.mxu0
        %982 = vrot.lane.b32.xlu0 %v671, 64
        %v983 = vpop.permute.xlu0 %982
        %v985 = vsel %vm679, %v930, 0
        %v988 = vsel %vm938, %v983, 0
        %990 = vmatprep.subr.bf16.mxu0 0
        %991 = vmatpush1.bf16.msra.mxu0 %v988
        %992 = vmatprep.subr.bf16.mxu0 0
        %993 = vmatpush1.bf16.msra.mxu0 0
        %994 = vmatprep.subr.bf16.mxu0 0
        %995 = vmatpush1.bf16.msra.mxu0 0
        %996 = vmatprep.subr.bf16.mxu0 0
        %997 = vmatpush1.bf16.msra.mxu0 0
        %998 = vmatprep.subr.bf16.mxu0 0
        %999 = vmatpush1.bf16.msra.mxu0 0
        %1000 = vmatprep.subr.bf16.mxu0 0
        %1001 = vmatpush1.bf16.msra.mxu0 0
        %1002 = vmatprep.subr.bf16.mxu0 0
        %1003 = vmatpush1.bf16.msra.mxu0 0
        %1004 = vmatprep.subr.bf16.mxu0 0
        %1005 = vmatpush1.bf16.msra.mxu0 0
        %1006 = vmatprep.subr.bf16.mxu0 0
        %1007 = vmatpush1.bf16.msra.mxu0 0
        %1008 = vmatprep.subr.bf16.mxu0 0
        %1009 = vmatpush1.bf16.msra.mxu0 0
        %1010 = vmatprep.subr.bf16.mxu0 0
        %1011 = vmatpush1.bf16.msra.mxu0 0
        %1012 = vmatprep.subr.bf16.mxu0 0
        %1013 = vmatpush1.bf16.msra.mxu0 0
        %1014 = vmatprep.subr.bf16.mxu0 0
        %1015 = vmatpush1.bf16.msra.mxu0 0
        %1016 = vmatprep.subr.bf16.mxu0 0
        %1017 = vmatpush1.bf16.msra.mxu0 0
        %1018 = vmatprep.subr.bf16.mxu0 0
        %1019 = vmatpush1.bf16.msra.mxu0 0
        %1020 = vmatprep.subr.bf16.mxu0 0
        %1021 = vmatpush1.bf16.msra.mxu0 0
        %1022 = vmatprep.mubr.bf16.mxu0 0
        %1023 = vmatmul.mubr.bf16.gmra.mrb[0].mxu0 %v985
        %v1024 = vpop.f32.mrb[0].mxu0
        %v1025 = vadd.f32 0.0, %v1024
        %v1026 = vpop.f32.mrb[0].mxu0
        %v1027 = vpop.f32.mrb[0].mxu0
        %v1028 = vpop.f32.mrb[0].mxu0
        %1029 = vdwg.mxu0
        %1030 = vrot.lane.b32.xlu0 %v672, 64
        %v1031 = vpop.permute.xlu0 %1030
        %v1033 = vsel %vm679, %v931, 0
        %v1036 = vsel %vm938, %v1031, 0
        %1038 = vmatprep.subr.bf16.mxu0 0
        %1039 = vmatpush1.bf16.msra.mxu0 %v1036
        %1040 = vmatprep.subr.bf16.mxu0 0
        %1041 = vmatpush1.bf16.msra.mxu0 0
        %1042 = vmatprep.subr.bf16.mxu0 0
        %1043 = vmatpush1.bf16.msra.mxu0 0
        %1044 = vmatprep.subr.bf16.mxu0 0
        %1045 = vmatpush1.bf16.msra.mxu0 0
        %1046 = vmatprep.subr.bf16.mxu0 0
        %1047 = vmatpush1.bf16.msra.mxu0 0
        %1048 = vmatprep.subr.bf16.mxu0 0
        %1049 = vmatpush1.bf16.msra.mxu0 0
        %1050 = vmatprep.subr.bf16.mxu0 0
        %1051 = vmatpush1.bf16.msra.mxu0 0
        %1052 = vmatprep.subr.bf16.mxu0 0
        %1053 = vmatpush1.bf16.msra.mxu0 0
        %1054 = vmatprep.subr.bf16.mxu0 0
        %1055 = vmatpush1.bf16.msra.mxu0 0
        %1056 = vmatprep.subr.bf16.mxu0 0
        %1057 = vmatpush1.bf16.msra.mxu0 0
        %1058 = vmatprep.subr.bf16.mxu0 0
        %1059 = vmatpush1.bf16.msra.mxu0 0
        %1060 = vmatprep.subr.bf16.mxu0 0
        %1061 = vmatpush1.bf16.msra.mxu0 0
        %1062 = vmatprep.subr.bf16.mxu0 0
        %1063 = vmatpush1.bf16.msra.mxu0 0
        %1064 = vmatprep.subr.bf16.mxu0 0
        %1065 = vmatpush1.bf16.msra.mxu0 0
        %1066 = vmatprep.subr.bf16.mxu0 0
        %1067 = vmatpush1.bf16.msra.mxu0 0
        %1068 = vmatprep.subr.bf16.mxu0 0
        %1069 = vmatpush1.bf16.msra.mxu0 0
        %1070 = vmatprep.mubr.bf16.mxu0 0
        %1071 = vmatmul.mubr.bf16.gmra.mrb[0].mxu0 %v1033
        %v1072 = vpop.f32.mrb[0].mxu0
        %v1073 = vadd.f32 0.0, %v1072
        %v1074 = vpop.f32.mrb[0].mxu0
        %v1075 = vpop.f32.mrb[0].mxu0
        %v1076 = vpop.f32.mrb[0].mxu0
        %1077 = vdwg.mxu0
        %1078 = vrot.lane.b32.xlu0 %v673, 64
        %v1079 = vpop.permute.xlu0 %1078
        %v1081 = vsel %vm679, %v932, 0
        %v1084 = vsel %vm938, %v1079, 0
        %1086 = vmatprep.subr.bf16.mxu0 0
        %1087 = vmatpush1.bf16.msra.mxu0 %v1084
        %1088 = vmatprep.subr.bf16.mxu0 0
        %1089 = vmatpush1.bf16.msra.mxu0 0
        %1090 = vmatprep.subr.bf16.mxu0 0
        %1091 = vmatpush1.bf16.msra.mxu0 0
        %1092 = vmatprep.subr.bf16.mxu0 0
        %1093 = vmatpush1.bf16.msra.mxu0 0
        %1094 = vmatprep.subr.bf16.mxu0 0
        %1095 = vmatpush1.bf16.msra.mxu0 0
        %1096 = vmatprep.subr.bf16.mxu0 0
        %1097 = vmatpush1.bf16.msra.mxu0 0
        %1098 = vmatprep.subr.bf16.mxu0 0
        %1099 = vmatpush1.bf16.msra.mxu0 0
        %1100 = vmatprep.subr.bf16.mxu0 0
        %1101 = vmatpush1.bf16.msra.mxu0 0
        %1102 = vmatprep.subr.bf16.mxu0 0
        %1103 = vmatpush1.bf16.msra.mxu0 0
        %1104 = vmatprep.subr.bf16.mxu0 0
        %1105 = vmatpush1.bf16.msra.mxu0 0
        %1106 = vmatprep.subr.bf16.mxu0 0
        %1107 = vmatpush1.bf16.msra.mxu0 0
        %1108 = vmatprep.subr.bf16.mxu0 0
        %1109 = vmatpush1.bf16.msra.mxu0 0
        %1110 = vmatprep.subr.bf16.mxu0 0
        %1111 = vmatpush1.bf16.msra.mxu0 0
        %1112 = vmatprep.subr.bf16.mxu0 0
        %1113 = vmatpush1.bf16.msra.mxu0 0
        %1114 = vmatprep.subr.bf16.mxu0 0
        %1115 = vmatpush1.bf16.msra.mxu0 0
        %1116 = vmatprep.subr.bf16.mxu0 0
        %1117 = vmatpush1.bf16.msra.mxu0 0
        %1118 = vmatprep.mubr.bf16.mxu0 0
        %1119 = vmatmul.mubr.bf16.gmra.mrb[0].mxu0 %v1081
        %v1120 = vpop.f32.mrb[0].mxu0
        %v1121 = vadd.f32 0.0, %v1120
        %v1122 = vpop.f32.mrb[0].mxu0
        %v1123 = vpop.f32.mrb[0].mxu0
        %v1124 = vpop.f32.mrb[0].mxu0
        %1125 = vdwg.mxu0
        %1127 = vrot.lane.b32.xlu0 %v1025, 8
        %v1128 = vpop.permute.xlu0 %1127
        %1131 = vrot.lane.b32.xlu0 %v1073, 16
        %v1132 = vpop.permute.xlu0 %1131
        %1135 = vrot.lane.b32.xlu0 %v1121, 24
        %v1136 = vpop.permute.xlu0 %1135
        %v1138 = vsel %vm679, %v977, %v1128
        %vm1139 = vcmask 130048
        %v1140 = vsel %vm1139, %v1138, %v1132
        %vm1141 = vcmask 195584
        %v1142 = vsel %vm1141, %v1140, %v1136
        %v1143 = vpack.c.bf16 %v646, %v646
        %v1144 = vpack.c.bf16 %v654, %v654
        %v1145 = vpack.c.bf16 %v660, %v660
        %v1146 = vpack.c.bf16 %v666, %v666
        %1148 = vrot.lane.b32.xlu0 %v1143, 96
        %v1149 = vpop.permute.xlu0 %1148
        %v1151 = vsel %vm679, %v1143, 0
        %v1154 = vsel %vm679, %v1149, 0
        %1156 = vmatprep.subr.bf16.mxu0 0
        %1157 = vmatpush1.bf16.xpose.msra.mxu0 %v1154
        %1158 = vmatprep.subr.bf16.mxu0 0
        %1159 = vmatpush1.bf16.xpose.msra.mxu0 0
        %1160 = vmatprep.subr.bf16.mxu0 0
        %1161 = vmatpush1.bf16.xpose.msra.mxu0 0
        %1162 = vmatprep.subr.bf16.mxu0 0
        %1163 = vmatpush1.bf16.xpose.msra.mxu0 0
        %1164 = vmatprep.subr.bf16.mxu0 0
        %1165 = vmatpush1.bf16.xpose.msra.mxu0 0
        %1166 = vmatprep.subr.bf16.mxu0 0
        %1167 = vmatpush1.bf16.xpose.msra.mxu0 0
        %1168 = vmatprep.subr.bf16.mxu0 0
        %1169 = vmatpush1.bf16.xpose.msra.mxu0 0
        %1170 = vmatprep.subr.bf16.mxu0 0
        %1171 = vmatpush1.bf16.xpose.msra.mxu0 0
        %1172 = vmatprep.subr.bf16.mxu0 0
        %1173 = vmatpush1.bf16.xpose.msra.mxu0 0
        %1174 = vmatprep.subr.bf16.mxu0 0
        %1175 = vmatpush1.bf16.xpose.msra.mxu0 0
        %1176 = vmatprep.subr.bf16.mxu0 0
        %1177 = vmatpush1.bf16.xpose.msra.mxu0 0
        %1178 = vmatprep.subr.bf16.mxu0 0
        %1179 = vmatpush1.bf16.xpose.msra.mxu0 0
        %1180 = vmatprep.subr.bf16.mxu0 0
        %1181 = vmatpush1.bf16.xpose.msra.mxu0 0
        %1182 = vmatprep.subr.bf16.mxu0 0
        %1183 = vmatpush1.bf16.xpose.msra.mxu0 0
        %1184 = vmatprep.subr.bf16.mxu0 0
        %1185 = vmatpush1.bf16.xpose.msra.mxu0 0
        %1186 = vmatprep.subr.bf16.mxu0 0
        %1187 = vmatpush1.bf16.xpose.msra.mxu0 0
        %1188 = vmatprep.mubr.bf16.mxu0 0
        %1189 = vmatmul.mubr.bf16.gmra.mrb[0].mxu0 %v1151
        %v1190 = vpop.f32.mrb[0].mxu0
        %v1191 = vadd.f32 0.0, %v1190
        %v1192 = vpop.f32.mrb[0].mxu0
        %v1193 = vpop.f32.mrb[0].mxu0
        %v1194 = vpop.f32.mrb[0].mxu0
        %1195 = vdwg.mxu0
        %1197 = vrot.lane.b32.xlu0 %v1144, 96
        %v1198 = vpop.permute.xlu0 %1197
        %v1200 = vsel %vm679, %v1144, 0
        %v1203 = vsel %vm679, %v1198, 0
        %1205 = vmatprep.subr.bf16.mxu0 0
        %1206 = vmatpush1.bf16.xpose.msra.mxu0 %v1203
        %1207 = vmatprep.subr.bf16.mxu0 0
        %1208 = vmatpush1.bf16.xpose.msra.mxu0 0
        %1209 = vmatprep.subr.bf16.mxu0 0
        %1210 = vmatpush1.bf16.xpose.msra.mxu0 0
        %1211 = vmatprep.subr.bf16.mxu0 0
        %1212 = vmatpush1.bf16.xpose.msra.mxu0 0
        %1213 = vmatprep.subr.bf16.mxu0 0
        %1214 = vmatpush1.bf16.xpose.msra.mxu0 0
        %1215 = vmatprep.subr.bf16.mxu0 0
        %1216 = vmatpush1.bf16.xpose.msra.mxu0 0
        %1217 = vmatprep.subr.bf16.mxu0 0
        %1218 = vmatpush1.bf16.xpose.msra.mxu0 0
        %1219 = vmatprep.subr.bf16.mxu0 0
        %1220 = vmatpush1.bf16.xpose.msra.mxu0 0
        %1221 = vmatprep.subr.bf16.mxu0 0
        %1222 = vmatpush1.bf16.xpose.msra.mxu0 0
        %1223 = vmatprep.subr.bf16.mxu0 0
        %1224 = vmatpush1.bf16.xpose.msra.mxu0 0
        %1225 = vmatprep.subr.bf16.mxu0 0
        %1226 = vmatpush1.bf16.xpose.msra.mxu0 0
        %1227 = vmatprep.subr.bf16.mxu0 0
        %1228 = vmatpush1.bf16.xpose.msra.mxu0 0
        %1229 = vmatprep.subr.bf16.mxu0 0
        %1230 = vmatpush1.bf16.xpose.msra.mxu0 0
        %1231 = vmatprep.subr.bf16.mxu0 0
        %1232 = vmatpush1.bf16.xpose.msra.mxu0 0
        %1233 = vmatprep.subr.bf16.mxu0 0
        %1234 = vmatpush1.bf16.xpose.msra.mxu0 0
        %1235 = vmatprep.subr.bf16.mxu0 0
        %1236 = vmatpush1.bf16.xpose.msra.mxu0 0
        %1237 = vmatprep.mubr.bf16.mxu0 0
        %1238 = vmatmul.mubr.bf16.gmra.mrb[0].mxu0 %v1200
        %v1239 = vpop.f32.mrb[0].mxu0
        %v1240 = vadd.f32 0.0, %v1239
        %v1241 = vpop.f32.mrb[0].mxu0
        %v1242 = vpop.f32.mrb[0].mxu0
        %v1243 = vpop.f32.mrb[0].mxu0
        %1244 = vdwg.mxu0
        %1246 = vrot.lane.b32.xlu0 %v1145, 96
        %v1247 = vpop.permute.xlu0 %1246
        %v1249 = vsel %vm679, %v1145, 0
        %v1252 = vsel %vm679, %v1247, 0
        %1254 = vmatprep.subr.bf16.mxu0 0
        %1255 = vmatpush1.bf16.xpose.msra.mxu0 %v1252
        %1256 = vmatprep.subr.bf16.mxu0 0
        %1257 = vmatpush1.bf16.xpose.msra.mxu0 0
        %1258 = vmatprep.subr.bf16.mxu0 0
        %1259 = vmatpush1.bf16.xpose.msra.mxu0 0
        %1260 = vmatprep.subr.bf16.mxu0 0
        %1261 = vmatpush1.bf16.xpose.msra.mxu0 0
        %1262 = vmatprep.subr.bf16.mxu0 0
        %1263 = vmatpush1.bf16.xpose.msra.mxu0 0
        %1264 = vmatprep.subr.bf16.mxu0 0
        %1265 = vmatpush1.bf16.xpose.msra.mxu0 0
        %1266 = vmatprep.subr.bf16.mxu0 0
        %1267 = vmatpush1.bf16.xpose.msra.mxu0 0
        %1268 = vmatprep.subr.bf16.mxu0 0
        %1269 = vmatpush1.bf16.xpose.msra.mxu0 0
        %1270 = vmatprep.subr.bf16.mxu0 0
        %1271 = vmatpush1.bf16.xpose.msra.mxu0 0
        %1272 = vmatprep.subr.bf16.mxu0 0
        %1273 = vmatpush1.bf16.xpose.msra.mxu0 0
        %1274 = vmatprep.subr.bf16.mxu0 0
        %1275 = vmatpush1.bf16.xpose.msra.mxu0 0
        %1276 = vmatprep.subr.bf16.mxu0 0
        %1277 = vmatpush1.bf16.xpose.msra.mxu0 0
        %1278 = vmatprep.subr.bf16.mxu0 0
        %1279 = vmatpush1.bf16.xpose.msra.mxu0 0
        %1280 = vmatprep.subr.bf16.mxu0 0
        %1281 = vmatpush1.bf16.xpose.msra.mxu0 0
        %1282 = vmatprep.subr.bf16.mxu0 0
        %1283 = vmatpush1.bf16.xpose.msra.mxu0 0
        %1284 = vmatprep.subr.bf16.mxu0 0
        %1285 = vmatpush1.bf16.xpose.msra.mxu0 0
        %1286 = vmatprep.mubr.bf16.mxu0 0
        %1287 = vmatmul.mubr.bf16.gmra.mrb[0].mxu0 %v1249
        %v1288 = vpop.f32.mrb[0].mxu0
        %v1289 = vadd.f32 0.0, %v1288
        %v1290 = vpop.f32.mrb[0].mxu0
        %v1291 = vpop.f32.mrb[0].mxu0
        %v1292 = vpop.f32.mrb[0].mxu0
        %1293 = vdwg.mxu0
        %1295 = vrot.lane.b32.xlu0 %v1146, 96
        %v1296 = vpop.permute.xlu0 %1295
        %v1298 = vsel %vm679, %v1146, 0
        %v1301 = vsel %vm679, %v1296, 0
        %1303 = vmatprep.subr.bf16.mxu0 0
        %1304 = vmatpush1.bf16.xpose.msra.mxu0 %v1301
        %1305 = vmatprep.subr.bf16.mxu0 0
        %1306 = vmatpush1.bf16.xpose.msra.mxu0 0
        %1307 = vmatprep.subr.bf16.mxu0 0
        %1308 = vmatpush1.bf16.xpose.msra.mxu0 0
        %1309 = vmatprep.subr.bf16.mxu0 0
        %1310 = vmatpush1.bf16.xpose.msra.mxu0 0
        %1311 = vmatprep.subr.bf16.mxu0 0
        %1312 = vmatpush1.bf16.xpose.msra.mxu0 0
        %1313 = vmatprep.subr.bf16.mxu0 0
        %1314 = vmatpush1.bf16.xpose.msra.mxu0 0
        %1315 = vmatprep.subr.bf16.mxu0 0
        %1316 = vmatpush1.bf16.xpose.msra.mxu0 0
        %1317 = vmatprep.subr.bf16.mxu0 0
        %1318 = vmatpush1.bf16.xpose.msra.mxu0 0
        %1319 = vmatprep.subr.bf16.mxu0 0
        %1320 = vmatpush1.bf16.xpose.msra.mxu0 0
        %1321 = vmatprep.subr.bf16.mxu0 0
        %1322 = vmatpush1.bf16.xpose.msra.mxu0 0
        %1323 = vmatprep.subr.bf16.mxu0 0
        %1324 = vmatpush1.bf16.xpose.msra.mxu0 0
        %1325 = vmatprep.subr.bf16.mxu0 0
        %1326 = vmatpush1.bf16.xpose.msra.mxu0 0
        %1327 = vmatprep.subr.bf16.mxu0 0
        %1328 = vmatpush1.bf16.xpose.msra.mxu0 0
        %1329 = vmatprep.subr.bf16.mxu0 0
        %1330 = vmatpush1.bf16.xpose.msra.mxu0 0
        %1331 = vmatprep.subr.bf16.mxu0 0
        %1332 = vmatpush1.bf16.xpose.msra.mxu0 0
        %1333 = vmatprep.subr.bf16.mxu0 0
        %1334 = vmatpush1.bf16.xpose.msra.mxu0 0
        %1335 = vmatprep.mubr.bf16.mxu0 0
        %1336 = vmatmul.mubr.bf16.gmra.mrb[0].mxu0 %v1298
        %v1337 = vpop.f32.mrb[0].mxu0
        %v1338 = vadd.f32 0.0, %v1337
        %v1339 = vpop.f32.mrb[0].mxu0
        %v1340 = vpop.f32.mrb[0].mxu0
        %v1341 = vpop.f32.mrb[0].mxu0
        %1342 = vdwg.mxu0
        %v1343 = vmul.f32 %v1191, 0.35355338
        %v1344 = vmul.f32 %v1240, 0.35355338
        %v1345 = vmul.f32 %v1289, 0.35355338
        %v1346 = vmul.f32 %v1338, 0.35355338
        %v1347 = vlaneseq
        %v1348 = vshrl.u32 %v1347, 7
        %v1349 = vsub.s32 1, %v1348
        %v1350 = vrot.slane %v675, %v1349
        %v1351 = vadd.f32 %v1343, %v1350
        %v1352 = vadd.f32 %v1344, %v1350
        %v1353 = vadd.f32 %v1345, %v1350
        %v1354 = vadd.f32 %v1346, %v1350
        %v1355 = vsel %vm679, %v1351, -inf
        %1356 = vmax.xlane.f32.xlu0 %v1355
        %v1357 = vpop.xlane.xlu0 %1356
        %v1358 = vsel %vm679, %v1352, -inf
        %1359 = vmax.xlane.f32.xlu0 %v1358
        %v1360 = vpop.xlane.xlu0 %1359
        %v1361 = vsel %vm679, %v1353, -inf
        %1362 = vmax.xlane.f32.xlu0 %v1361
        %v1363 = vpop.xlane.xlu0 %1362
        %v1364 = vsel %vm679, %v1354, -inf
        %1365 = vmax.xlane.f32.xlu0 %v1364
        %v1366 = vpop.xlane.xlu0 %1365
        %v1367 = vsub.f32 %v1351, %v1357
        %v1368 = vsub.f32 %v1352, %v1360
        %v1369 = vsub.f32 %v1353, %v1363
        %v1370 = vsub.f32 %v1354, %v1366
        %v1371 = vmul.f32 %v1367, 1.442695
        %v1372 = vpow.pop %v1371
        %v1373 = vmul.f32 %v1368, 1.442695
        %v1374 = vpow.pop %v1373
        %v1375 = vmul.f32 %v1369, 1.442695
        %v1376 = vpow.pop %v1375
        %v1377 = vmul.f32 %v1370, 1.442695
        %v1378 = vpow.pop %v1377
        %v1379 = vsel %vm679, %v1372, 0.0
        %1380 = vadd.xlane.f32.xlu0 %v1379
        %v1381 = vpop.xlane.xlu0 %1380
        %v1382 = vsel %vm679, %v1374, 0.0
        %1383 = vadd.xlane.f32.xlu0 %v1382
        %v1384 = vpop.xlane.xlu0 %1383
        %v1385 = vsel %vm679, %v1376, 0.0
        %1386 = vadd.xlane.f32.xlu0 %v1385
        %v1387 = vpop.xlane.xlu0 %1386
        %v1388 = vsel %vm679, %v1378, 0.0
        %1389 = vadd.xlane.f32.xlu0 %v1388
        %v1390 = vpop.xlane.xlu0 %1389
        %v1391 = vrcp.pop %v1381
        %v1392 = vrcp.pop %v1384
        %v1393 = vrcp.pop %v1387
        %v1394 = vrcp.pop %v1390
        %v1395 = vmul.f32 %v1372, %v1391
        %v1396 = vmul.f32 %v1374, %v1392
        %v1397 = vmul.f32 %v1376, %v1393
        %v1398 = vmul.f32 %v1378, %v1394
        %v1399 = vpack.c.bf16 %v1395, %v1395
        %v1400 = vpack.c.bf16 %v1396, %v1396
        %v1401 = vpack.c.bf16 %v1397, %v1397
        %v1402 = vpack.c.bf16 %v1398, %v1398
        %1403 = vrot.lane.b32.xlu0 %v1143, 64
        %v1404 = vpop.permute.xlu0 %1403
        %v1406 = vsel %vm679, %v1399, 0
        %v1409 = vsel %vm938, %v1404, 0
        %1411 = vmatprep.subr.bf16.mxu0 0
        %1412 = vmatpush1.bf16.msra.mxu0 %v1409
        %1413 = vmatprep.subr.bf16.mxu0 0
        %1414 = vmatpush1.bf16.msra.mxu0 0
        %1415 = vmatprep.subr.bf16.mxu0 0
        %1416 = vmatpush1.bf16.msra.mxu0 0
        %1417 = vmatprep.subr.bf16.mxu0 0
        %1418 = vmatpush1.bf16.msra.mxu0 0
        %1419 = vmatprep.subr.bf16.mxu0 0
        %1420 = vmatpush1.bf16.msra.mxu0 0
        %1421 = vmatprep.subr.bf16.mxu0 0
        %1422 = vmatpush1.bf16.msra.mxu0 0
        %1423 = vmatprep.subr.bf16.mxu0 0
        %1424 = vmatpush1.bf16.msra.mxu0 0
        %1425 = vmatprep.subr.bf16.mxu0 0
        %1426 = vmatpush1.bf16.msra.mxu0 0
        %1427 = vmatprep.subr.bf16.mxu0 0
        %1428 = vmatpush1.bf16.msra.mxu0 0
        %1429 = vmatprep.subr.bf16.mxu0 0
        %1430 = vmatpush1.bf16.msra.mxu0 0
        %1431 = vmatprep.subr.bf16.mxu0 0
        %1432 = vmatpush1.bf16.msra.mxu0 0
        %1433 = vmatprep.subr.bf16.mxu0 0
        %1434 = vmatpush1.bf16.msra.mxu0 0
        %1435 = vmatprep.subr.bf16.mxu0 0
        %1436 = vmatpush1.bf16.msra.mxu0 0
        %1437 = vmatprep.subr.bf16.mxu0 0
        %1438 = vmatpush1.bf16.msra.mxu0 0
        %1439 = vmatprep.subr.bf16.mxu0 0
        %1440 = vmatpush1.bf16.msra.mxu0 0
        %1441 = vmatprep.subr.bf16.mxu0 0
        %1442 = vmatpush1.bf16.msra.mxu0 0
        %1443 = vmatprep.mubr.bf16.mxu0 0
        %1444 = vmatmul.mubr.bf16.gmra.mrb[0].mxu0 %v1406
        %v1445 = vpop.f32.mrb[0].mxu0
        %v1446 = vadd.f32 0.0, %v1445
        %v1447 = vpop.f32.mrb[0].mxu0
        %v1448 = vpop.f32.mrb[0].mxu0
        %v1449 = vpop.f32.mrb[0].mxu0
        %1450 = vdwg.mxu0
        %1451 = vrot.lane.b32.xlu0 %v1144, 64
        %v1452 = vpop.permute.xlu0 %1451
        %v1454 = vsel %vm679, %v1400, 0
        %v1457 = vsel %vm938, %v1452, 0
        %1459 = vmatprep.subr.bf16.mxu0 0
        %1460 = vmatpush1.bf16.msra.mxu0 %v1457
        %1461 = vmatprep.subr.bf16.mxu0 0
        %1462 = vmatpush1.bf16.msra.mxu0 0
        %1463 = vmatprep.subr.bf16.mxu0 0
        %1464 = vmatpush1.bf16.msra.mxu0 0
        %1465 = vmatprep.subr.bf16.mxu0 0
        %1466 = vmatpush1.bf16.msra.mxu0 0
        %1467 = vmatprep.subr.bf16.mxu0 0
        %1468 = vmatpush1.bf16.msra.mxu0 0
        %1469 = vmatprep.subr.bf16.mxu0 0
        %1470 = vmatpush1.bf16.msra.mxu0 0
        %1471 = vmatprep.subr.bf16.mxu0 0
        %1472 = vmatpush1.bf16.msra.mxu0 0
        %1473 = vmatprep.subr.bf16.mxu0 0
        %1474 = vmatpush1.bf16.msra.mxu0 0
        %1475 = vmatprep.subr.bf16.mxu0 0
        %1476 = vmatpush1.bf16.msra.mxu0 0
        %1477 = vmatprep.subr.bf16.mxu0 0
        %1478 = vmatpush1.bf16.msra.mxu0 0
        %1479 = vmatprep.subr.bf16.mxu0 0
        %1480 = vmatpush1.bf16.msra.mxu0 0
        %1481 = vmatprep.subr.bf16.mxu0 0
        %1482 = vmatpush1.bf16.msra.mxu0 0
        %1483 = vmatprep.subr.bf16.mxu0 0
        %1484 = vmatpush1.bf16.msra.mxu0 0
        %1485 = vmatprep.subr.bf16.mxu0 0
        %1486 = vmatpush1.bf16.msra.mxu0 0
        %1487 = vmatprep.subr.bf16.mxu0 0
        %1488 = vmatpush1.bf16.msra.mxu0 0
        %1489 = vmatprep.subr.bf16.mxu0 0
        %1490 = vmatpush1.bf16.msra.mxu0 0
        %1491 = vmatprep.mubr.bf16.mxu0 0
        %1492 = vmatmul.mubr.bf16.gmra.mrb[0].mxu0 %v1454
        %v1493 = vpop.f32.mrb[0].mxu0
        %v1494 = vadd.f32 0.0, %v1493
        %v1495 = vpop.f32.mrb[0].mxu0
        %v1496 = vpop.f32.mrb[0].mxu0
        %v1497 = vpop.f32.mrb[0].mxu0
        %1498 = vdwg.mxu0
        %1499 = vrot.lane.b32.xlu0 %v1145, 64
        %v1500 = vpop.permute.xlu0 %1499
        %v1502 = vsel %vm679, %v1401, 0
        %v1505 = vsel %vm938, %v1500, 0
        %1507 = vmatprep.subr.bf16.mxu0 0
        %1508 = vmatpush1.bf16.msra.mxu0 %v1505
        %1509 = vmatprep.subr.bf16.mxu0 0
        %1510 = vmatpush1.bf16.msra.mxu0 0
        %1511 = vmatprep.subr.bf16.mxu0 0
        %1512 = vmatpush1.bf16.msra.mxu0 0
        %1513 = vmatprep.subr.bf16.mxu0 0
        %1514 = vmatpush1.bf16.msra.mxu0 0
        %1515 = vmatprep.subr.bf16.mxu0 0
        %1516 = vmatpush1.bf16.msra.mxu0 0
        %1517 = vmatprep.subr.bf16.mxu0 0
        %1518 = vmatpush1.bf16.msra.mxu0 0
        %1519 = vmatprep.subr.bf16.mxu0 0
        %1520 = vmatpush1.bf16.msra.mxu0 0
        %1521 = vmatprep.subr.bf16.mxu0 0
        %1522 = vmatpush1.bf16.msra.mxu0 0
        %1523 = vmatprep.subr.bf16.mxu0 0
        %1524 = vmatpush1.bf16.msra.mxu0 0
        %1525 = vmatprep.subr.bf16.mxu0 0
        %1526 = vmatpush1.bf16.msra.mxu0 0
        %1527 = vmatprep.subr.bf16.mxu0 0
        %1528 = vmatpush1.bf16.msra.mxu0 0
        %1529 = vmatprep.subr.bf16.mxu0 0
        %1530 = vmatpush1.bf16.msra.mxu0 0
        %1531 = vmatprep.subr.bf16.mxu0 0
        %1532 = vmatpush1.bf16.msra.mxu0 0
        %1533 = vmatprep.subr.bf16.mxu0 0
        %1534 = vmatpush1.bf16.msra.mxu0 0
        %1535 = vmatprep.subr.bf16.mxu0 0
        %1536 = vmatpush1.bf16.msra.mxu0 0
        %1537 = vmatprep.subr.bf16.mxu0 0
        %1538 = vmatpush1.bf16.msra.mxu0 0
        %1539 = vmatprep.mubr.bf16.mxu0 0
        %1540 = vmatmul.mubr.bf16.gmra.mrb[0].mxu0 %v1502
        %v1541 = vpop.f32.mrb[0].mxu0
        %v1542 = vadd.f32 0.0, %v1541
        %v1543 = vpop.f32.mrb[0].mxu0
        %v1544 = vpop.f32.mrb[0].mxu0
        %v1545 = vpop.f32.mrb[0].mxu0
        %1546 = vdwg.mxu0
        %1547 = vrot.lane.b32.xlu0 %v1146, 64
        %v1548 = vpop.permute.xlu0 %1547
        %v1550 = vsel %vm679, %v1402, 0
        %v1553 = vsel %vm938, %v1548, 0
        %1555 = vmatprep.subr.bf16.mxu0 0
        %1556 = vmatpush1.bf16.msra.mxu0 %v1553
        %1557 = vmatprep.subr.bf16.mxu0 0
        %1558 = vmatpush1.bf16.msra.mxu0 0
        %1559 = vmatprep.subr.bf16.mxu0 0
        %1560 = vmatpush1.bf16.msra.mxu0 0
        %1561 = vmatprep.subr.bf16.mxu0 0
        %1562 = vmatpush1.bf16.msra.mxu0 0
        %1563 = vmatprep.subr.bf16.mxu0 0
        %1564 = vmatpush1.bf16.msra.mxu0 0
        %1565 = vmatprep.subr.bf16.mxu0 0
        %1566 = vmatpush1.bf16.msra.mxu0 0
        %1567 = vmatprep.subr.bf16.mxu0 0
        %1568 = vmatpush1.bf16.msra.mxu0 0
        %1569 = vmatprep.subr.bf16.mxu0 0
        %1570 = vmatpush1.bf16.msra.mxu0 0
        %1571 = vmatprep.subr.bf16.mxu0 0
        %1572 = vmatpush1.bf16.msra.mxu0 0
        %1573 = vmatprep.subr.bf16.mxu0 0
        %1574 = vmatpush1.bf16.msra.mxu0 0
        %1575 = vmatprep.subr.bf16.mxu0 0
        %1576 = vmatpush1.bf16.msra.mxu0 0
        %1577 = vmatprep.subr.bf16.mxu0 0
        %1578 = vmatpush1.bf16.msra.mxu0 0
        %1579 = vmatprep.subr.bf16.mxu0 0
        %1580 = vmatpush1.bf16.msra.mxu0 0
        %1581 = vmatprep.subr.bf16.mxu0 0
        %1582 = vmatpush1.bf16.msra.mxu0 0
        %1583 = vmatprep.subr.bf16.mxu0 0
        %1584 = vmatpush1.bf16.msra.mxu0 0
        %1585 = vmatprep.subr.bf16.mxu0 0
        %1586 = vmatpush1.bf16.msra.mxu0 0
        %1587 = vmatprep.mubr.bf16.mxu0 0
        %1588 = vmatmul.mubr.bf16.gmra.mrb[0].mxu0 %v1550
        %v1589 = vpop.f32.mrb[0].mxu0
        %v1590 = vadd.f32 0.0, %v1589
        %v1591 = vpop.f32.mrb[0].mxu0
        %v1592 = vpop.f32.mrb[0].mxu0
        %v1593 = vpop.f32.mrb[0].mxu0
        %1594 = vdwg.mxu0
        %1596 = vrot.lane.b32.xlu0 %v1494, 8
        %v1597 = vpop.permute.xlu0 %1596
        %1600 = vrot.lane.b32.xlu0 %v1542, 16
        %v1601 = vpop.permute.xlu0 %1600
        %1604 = vrot.lane.b32.xlu0 %v1590, 24
        %v1605 = vpop.permute.xlu0 %1604
        %v1607 = vsel %vm679, %v1446, %v1597
        %v1608 = vsel %vm1139, %v1607, %v1601
        %v1609 = vsel %vm1141, %v1608, %v1605
        %v1610 = vpack.c.bf16 %v1609, %v1142
        %v1611 = vld [vmem:[%s515] sm:$0xf]
        %v1612 = vld [vmem:[%s515 + $0x4] sm:$0xf]
        %v1613 = vld [vmem:[%s515 + $0x8] sm:$0xf]
        %v1614 = vld [vmem:[%s515 + $0xc] sm:$0xf]
        %v1615 = vlaneseq
        %v1616 = vshrl.u32 %v1615, 7
        %v1617 = vsub.s32 1, %v1616
        %v1618 = vrot.slane %v582, %v1617
        %v1623 = vunpack.c.l.b16 %v1611
        %v1624 = vunpack.c.l.b16 %v1612
        %v1625 = vunpack.c.l.b16 %v1613
        %v1626 = vunpack.c.l.b16 %v1614
        %v1627 = vpack.c.b16 %v1624, %v1623
        %v1628 = vpack.c.b16 %v1626, %v1625
        %v1632 = vsel %vm604, %v1610, 0
        %1634 = vmatprep.subr.bf16.mxu0 0
        %1635 = vmatpush1.bf16.msra.mxu0 %v1627
        %1636 = vmatprep.subr.bf16.mxu0 0
        %1637 = vmatpush1.bf16.msra.mxu0 %v1628
        %1638 = vmatprep.subr.bf16.mxu0 0
        %1639 = vmatpush1.bf16.msra.mxu0 0
        %1640 = vmatprep.subr.bf16.mxu0 0
        %1641 = vmatpush1.bf16.msra.mxu0 0
        %1642 = vmatprep.subr.bf16.mxu0 0
        %1643 = vmatpush1.bf16.msra.mxu0 0
        %1644 = vmatprep.subr.bf16.mxu0 0
        %1645 = vmatpush1.bf16.msra.mxu0 0
        %1646 = vmatprep.subr.bf16.mxu0 0
        %1647 = vmatpush1.bf16.msra.mxu0 0
        %1648 = vmatprep.subr.bf16.mxu0 0
        %1649 = vmatpush1.bf16.msra.mxu0 0
        %1650 = vmatprep.subr.bf16.mxu0 0
        %1651 = vmatpush1.bf16.msra.mxu0 0
        %1652 = vmatprep.subr.bf16.mxu0 0
        %1653 = vmatpush1.bf16.msra.mxu0 0
        %1654 = vmatprep.subr.bf16.mxu0 0
        %1655 = vmatpush1.bf16.msra.mxu0 0
        %1656 = vmatprep.subr.bf16.mxu0 0
        %1657 = vmatpush1.bf16.msra.mxu0 0
        %1658 = vmatprep.subr.bf16.mxu0 0
        %1659 = vmatpush1.bf16.msra.mxu0 0
        %1660 = vmatprep.subr.bf16.mxu0 0
        %1661 = vmatpush1.bf16.msra.mxu0 0
        %1662 = vmatprep.subr.bf16.mxu0 0
        %1663 = vmatpush1.bf16.msra.mxu0 0
        %1664 = vmatprep.subr.bf16.mxu0 0
        %1665 = vmatpush1.bf16.msra.mxu0 0
        %1666 = vmatprep.mubr.bf16.mxu0 0
        %1667 = vmatmul.mubr.bf16.gmra.mrb[0].mxu0 %v1632
        %v1668 = vpop.f32.mrb[0].mxu0
        %v1669 = vadd.f32 %v1618, %v1668
        %v1670 = vpop.f32.mrb[0].mxu0
        %v1671 = vpop.f32.mrb[0].mxu0
        %v1672 = vadd.f32 %v1618, %v1671
        %v1673 = vpop.f32.mrb[0].mxu0
        %1674 = vdwg.mxu0
        %v1675 = vadd.f32 %v580, %v1669
        %v1676 = vadd.f32 %v581, %v1672
        %v1677 = vsel %vm604, %v1675, 0.0
        %1678 = vadd.xlane.f32.xlu0 %v1677
        %v1679 = vpop.xlane.xlu0 %1678
        %v1680 = vsel %vm604, %v1676, 0.0
        %1681 = vadd.xlane.f32.xlu0 %v1680
        %v1682 = vpop.xlane.xlu0 %1681
        %v1683 = vrcp.pop 32.0
        %v1684 = vmul.f32 %v1679, %v1683
        %v1685 = vmul.f32 %v1682, %v1683
        %v1686 = vsub.f32 %v1675, %v1684
        %v1687 = vsub.f32 %v1676, %v1685
        %v1688 = vmul.f32 %v1686, %v1686
        %v1689 = vmul.f32 %v1687, %v1687
        %v1690 = vsel %vm604, %v1688, 0.0
        %1691 = vadd.xlane.f32.xlu0 %v1690
        %v1692 = vpop.xlane.xlu0 %1691
        %v1693 = vsel %vm604, %v1689, 0.0
        %1694 = vadd.xlane.f32.xlu0 %v1693
        %v1695 = vpop.xlane.xlu0 %1694
        %v1696 = vmul.f32 %v1692, %v1683
        %v1697 = vmul.f32 %v1695, %v1683
        %v1698 = vadd.f32 %v1696, 1e-12
        %v1699 = vadd.f32 %v1697, 1e-12
        %v1700 = vrsqrt.pop %v1698
        %v1701 = vrsqrt.pop %v1699
        %v1702 = vmul.f32 %v1686, %v1700
        %v1703 = vmul.f32 %v1687, %v1701
        %1705 = vrot.lane.b32.xlu0 %v1618, 96
        %v1706 = vpop.permute.xlu0 %1705
        %v1708 = vmul.f32 %v1702, %v1706
        %v1709 = vmul.f32 %v1703, %v1706
        %1710 = vrot.lane.b32.xlu0 %v1618, 64
        %v1711 = vpop.permute.xlu0 %1710
        %v1713 = vadd.f32 %v1708, %v1711
        %v1714 = vadd.f32 %v1709, %v1711
        %v1715 = vpack.c.bf16 %v1714, %v1713
        %v1716 = vld [vmem:[%s520] sm:$0xf]
        %v1717 = vld [vmem:[%s520 + $0x4] sm:$0xf]
        %v1718 = vld [vmem:[%s520 + $0x8] sm:$0xf]
        %v1719 = vld [vmem:[%s520 + $0xc] sm:$0xf]
        %v1720 = vlaneseq
        %v1721 = vshrl.u32 %v1720, 7
        %v1722 = vsub.s32 2, %v1721
        %v1723 = vrot.slane %v582, %v1722
        %v1728 = vunpack.c.l.b16 %v1716
        %v1729 = vunpack.c.l.b16 %v1717
        %v1730 = vunpack.c.l.b16 %v1718
        %v1731 = vunpack.c.l.b16 %v1719
        %v1732 = vpack.c.b16 %v1729, %v1728
        %v1733 = vpack.c.b16 %v1731, %v1730
        %v1737 = vsel %vm604, %v1715, 0
        %1739 = vmatprep.subr.bf16.mxu0 0
        %1740 = vmatpush1.bf16.msra.mxu0 %v1732
        %1741 = vmatprep.subr.bf16.mxu0 0
        %1742 = vmatpush1.bf16.msra.mxu0 %v1733
        %1743 = vmatprep.subr.bf16.mxu0 0
        %1744 = vmatpush1.bf16.msra.mxu0 0
        %1745 = vmatprep.subr.bf16.mxu0 0
        %1746 = vmatpush1.bf16.msra.mxu0 0
        %1747 = vmatprep.subr.bf16.mxu0 0
        %1748 = vmatpush1.bf16.msra.mxu0 0
        %1749 = vmatprep.subr.bf16.mxu0 0
        %1750 = vmatpush1.bf16.msra.mxu0 0
        %1751 = vmatprep.subr.bf16.mxu0 0
        %1752 = vmatpush1.bf16.msra.mxu0 0
        %1753 = vmatprep.subr.bf16.mxu0 0
        %1754 = vmatpush1.bf16.msra.mxu0 0
        %1755 = vmatprep.subr.bf16.mxu0 0
        %1756 = vmatpush1.bf16.msra.mxu0 0
        %1757 = vmatprep.subr.bf16.mxu0 0
        %1758 = vmatpush1.bf16.msra.mxu0 0
        %1759 = vmatprep.subr.bf16.mxu0 0
        %1760 = vmatpush1.bf16.msra.mxu0 0
        %1761 = vmatprep.subr.bf16.mxu0 0
        %1762 = vmatpush1.bf16.msra.mxu0 0
        %1763 = vmatprep.subr.bf16.mxu0 0
        %1764 = vmatpush1.bf16.msra.mxu0 0
        %1765 = vmatprep.subr.bf16.mxu0 0
        %1766 = vmatpush1.bf16.msra.mxu0 0
        %1767 = vmatprep.subr.bf16.mxu0 0
        %1768 = vmatpush1.bf16.msra.mxu0 0
        %1769 = vmatprep.subr.bf16.mxu0 0
        %1770 = vmatpush1.bf16.msra.mxu0 0
        %1771 = vmatprep.mubr.bf16.mxu0 0
        %1772 = vmatmul.mubr.bf16.gmra.mrb[0].mxu0 %v1737
        %v1773 = vpop.f32.mrb[0].mxu0
        %v1774 = vadd.f32 %v1723, %v1773
        %v1775 = vpop.f32.mrb[0].mxu0
        %v1776 = vpop.f32.mrb[0].mxu0
        %v1777 = vadd.f32 %v1723, %v1776
        %v1778 = vpop.f32.mrb[0].mxu0
        %1779 = vdwg.mxu0
        %v1780 = vmul.f32 %v1774, 0.5
        %v1781 = vmul.f32 %v1777, 0.5
        %v1782 = vmul.f32 %v1774, 0.044715
        %v1783 = vmul.f32 %v1777, 0.044715
        %v1784 = vmul.f32 %v1782, %v1774
        %v1785 = vmul.f32 %v1783, %v1777
        %v1786 = vmul.f32 %v1784, %v1774
        %v1787 = vmul.f32 %v1785, %v1777
        %v1788 = vadd.f32 %v1774, %v1786
        %v1789 = vadd.f32 %v1777, %v1787
        %v1790 = vmul.f32 %v1788, 0.7978846
        %v1791 = vmul.f32 %v1789, 0.7978846
        %v1792 = vtanh.pop %v1790
        %v1793 = vtanh.pop %v1791
        %v1794 = vadd.f32 %v1792, 1.0
        %v1795 = vadd.f32 %v1793, 1.0
        %v1796 = vmul.f32 %v1780, %v1794
        %v1797 = vmul.f32 %v1781, %v1795
        %v1798 = vpack.c.bf16 %v1797, %v1796
        %v1799 = vld [vmem:[%s525] sm:$0xf]
        %v1800 = vld [vmem:[%s525 + $0x4] sm:$0xf]
        %v1801 = vld [vmem:[%s525 + $0x8] sm:$0xf]
        %v1802 = vld [vmem:[%s525 + $0xc] sm:$0xf]
        %v1803 = vld [vmem:[%s525 + $0x10] sm:$0xf]
        %v1804 = vld [vmem:[%s525 + $0x14] sm:$0xf]
        %v1805 = vld [vmem:[%s525 + $0x18] sm:$0xf]
        %v1806 = vld [vmem:[%s525 + $0x1c] sm:$0xf]
        %v1807 = vlaneseq
        %v1808 = vshrl.u32 %v1807, 7
        %v1809 = vsub.s32 3, %v1808
        %v1810 = vrot.slane %v582, %v1809
        %v1819 = vunpack.c.l.b16 %v1799
        %v1820 = vunpack.c.l.b16 %v1800
        %v1821 = vunpack.c.l.b16 %v1801
        %v1822 = vunpack.c.l.b16 %v1802
        %v1823 = vunpack.c.l.b16 %v1803
        %v1824 = vunpack.c.l.b16 %v1804
        %v1825 = vunpack.c.l.b16 %v1805
        %v1826 = vunpack.c.l.b16 %v1806
        %v1827 = vpack.c.b16 %v1820, %v1819
        %v1828 = vpack.c.b16 %v1822, %v1821
        %v1829 = vpack.c.b16 %v1824, %v1823
        %v1830 = vpack.c.b16 %v1826, %v1825
        %vm1835 = vcmask 523264
        %v1837 = vsel %vm1835, %v1798, 0
        %1839 = vmatprep.subr.bf16.mxu0 0
        %1840 = vmatpush1.bf16.msra.mxu0 %v1827
        %1841 = vmatprep.subr.bf16.mxu0 0
        %1842 = vmatpush1.bf16.msra.mxu0 %v1828
        %1843 = vmatprep.subr.bf16.mxu0 0
        %1844 = vmatpush1.bf16.msra.mxu0 %v1829
        %1845 = vmatprep.subr.bf16.mxu0 0
        %1846 = vmatpush1.bf16.msra.mxu0 %v1830
        %1847 = vmatprep.subr.bf16.mxu0 0
        %1848 = vmatpush1.bf16.msra.mxu0 0
        %1849 = vmatprep.subr.bf16.mxu0 0
        %1850 = vmatpush1.bf16.msra.mxu0 0
        %1851 = vmatprep.subr.bf16.mxu0 0
        %1852 = vmatpush1.bf16.msra.mxu0 0
        %1853 = vmatprep.subr.bf16.mxu0 0
        %1854 = vmatpush1.bf16.msra.mxu0 0
        %1855 = vmatprep.subr.bf16.mxu0 0
        %1856 = vmatpush1.bf16.msra.mxu0 0
        %1857 = vmatprep.subr.bf16.mxu0 0
        %1858 = vmatpush1.bf16.msra.mxu0 0
        %1859 = vmatprep.subr.bf16.mxu0 0
        %1860 = vmatpush1.bf16.msra.mxu0 0
        %1861 = vmatprep.subr.bf16.mxu0 0
        %1862 = vmatpush1.bf16.msra.mxu0 0
        %1863 = vmatprep.subr.bf16.mxu0 0
        %1864 = vmatpush1.bf16.msra.mxu0 0
        %1865 = vmatprep.subr.bf16.mxu0 0
        %1866 = vmatpush1.bf16.msra.mxu0 0
        %1867 = vmatprep.subr.bf16.mxu0 0
        %1868 = vmatpush1.bf16.msra.mxu0 0
        %1869 = vmatprep.subr.bf16.mxu0 0
        %1870 = vmatpush1.bf16.msra.mxu0 0
        %1871 = vmatprep.mubr.bf16.mxu0 0
        %1872 = vmatmul.mubr.bf16.gmra.mrb[0].mxu0 %v1837
        %v1873 = vpop.f32.mrb[0].mxu0
        %v1874 = vadd.f32 %v1810, %v1873
        %v1875 = vpop.f32.mrb[0].mxu0
        %v1876 = vpop.f32.mrb[0].mxu0
        %v1877 = vadd.f32 %v1810, %v1876
        %v1878 = vpop.f32.mrb[0].mxu0
        %1879 = vdwg.mxu0
        %v1880 = vadd.f32 %v1713, %v1874
        %v1881 = vadd.f32 %v1714, %v1877
        %v1882 = vsel %vm604, %v1880, 0.0
        %1883 = vadd.xlane.f32.xlu0 %v1882
        %v1884 = vpop.xlane.xlu0 %1883
        %v1885 = vsel %vm604, %v1881, 0.0
        %1886 = vadd.xlane.f32.xlu0 %v1885
        %v1887 = vpop.xlane.xlu0 %1886
        %v1888 = vmul.f32 %v1884, %v1683
        %v1889 = vmul.f32 %v1887, %v1683
        %v1890 = vsub.f32 %v1880, %v1888
        %v1891 = vsub.f32 %v1881, %v1889
        %v1892 = vmul.f32 %v1890, %v1890
        %v1893 = vmul.f32 %v1891, %v1891
        %v1894 = vsel %vm604, %v1892, 0.0
        %1895 = vadd.xlane.f32.xlu0 %v1894
        %v1896 = vpop.xlane.xlu0 %1895
        %v1897 = vsel %vm604, %v1893, 0.0
        %1898 = vadd.xlane.f32.xlu0 %v1897
        %v1899 = vpop.xlane.xlu0 %1898
        %v1900 = vmul.f32 %v1896, %v1683
        %v1901 = vmul.f32 %v1899, %v1683
        %v1902 = vadd.f32 %v1900, 1e-12
        %v1903 = vadd.f32 %v1901, 1e-12
        %v1904 = vrsqrt.pop %v1902
        %v1905 = vrsqrt.pop %v1903
        %v1906 = vmul.f32 %v1890, %v1904
        %v1907 = vmul.f32 %v1891, %v1905
        %1909 = vrot.lane.b32.xlu0 %v1810, 96
        %v1910 = vpop.permute.xlu0 %1909
        %v1912 = vmul.f32 %v1906, %v1910
        %v1913 = vmul.f32 %v1907, %v1910
        %1914 = vrot.lane.b32.xlu0 %v1810, 64
        %v1915 = vpop.permute.xlu0 %1914
        %v1917 = vadd.f32 %v1912, %v1915
        %v1918 = vadd.f32 %v1913, %v1915
        %1919 = vst.msk [vmem:[#allocation2] sm:$0xff] %vm604, %v1917
        %1920 = vst.msk [vmem:[#allocation2 + $0x8] sm:$0xff] %vm604, %v1918
        %p1921 = scmp.eq.s32.totalorder %s28, 1
        // Predicated region
        $region77: #{action_bert_forward.1} parent=71 // pred_check
          %p1922 = pneg %p1921
        $region78: #{action_bert_forward.1} parent=71 // pred_check_branch
          %1924 = sbr.rel (%p1922) target = $region80
        $region79: #{action_bert_forward.1} parent=71 // pred_region
          %v1926 = vrot.slane %v1918, 7
          %vm1928 = vcmask 1040384
          %v1929 = vsel %vm1928, %v1917, %v1926
          %v1930 = vpack.c.bf16 %v1929, %v1929
          %v1931 = vld [vmem:[%s8] sm:$0xf]
          %v1932 = vld [vmem:[%s8 + $0x4] sm:$0xf]
          %v1933 = vld [vmem:[%s8 + $0x8] sm:$0xf]
          %v1934 = vld [vmem:[%s8 + $0xc] sm:$0xf]
          %v1935 = vld [vmem:[%s9] sm:$0x1]
          %v1937 = vlaneseq
          %v1938 = vshrl.u32 %v1937, 7
          %v1939 = vsub.s32 0, %v1938
          %v1940 = vrot.slane %v1935, %v1939
          %v1946 = vunpack.c.l.b16 %v1931
          %v1947 = vunpack.c.l.b16 %v1932
          %v1948 = vunpack.c.l.b16 %v1933
          %v1949 = vunpack.c.l.b16 %v1934
          %v1950 = vpack.c.b16 %v1947, %v1946
          %v1951 = vpack.c.b16 %v1949, %v1948
          %v1955 = vsel %vm604, %v1930, 0
          %1957 = vmatprep.subr.bf16.mxu0 0
          %1958 = vmatpush1.bf16.msra.mxu0 %v1950
          %1959 = vmatprep.subr.bf16.mxu0 0
          %1960 = vmatpush1.bf16.msra.mxu0 %v1951
          %1961 = vmatprep.subr.bf16.mxu0 0
          %1962 = vmatpush1.bf16.msra.mxu0 0
          %1963 = vmatprep.subr.bf16.mxu0 0
          %1964 = vmatpush1.bf16.msra.mxu0 0
          %1965 = vmatprep.subr.bf16.mxu0 0
          %1966 = vmatpush1.bf16.msra.mxu0 0
          %1967 = vmatprep.subr.bf16.mxu0 0
          %1968 = vmatpush1.bf16.msra.mxu0 0
          %1969 = vmatprep.subr.bf16.mxu0 0
          %1970 = vmatpush1.bf16.msra.mxu0 0
          %1971 = vmatprep.subr.bf16.mxu0 0
          %1972 = vmatpush1.bf16.msra.mxu0 0
          %1973 = vmatprep.subr.bf16.mxu0 0
          %1974 = vmatpush1.bf16.msra.mxu0 0
          %1975 = vmatprep.subr.bf16.mxu0 0
          %1976 = vmatpush1.bf16.msra.mxu0 0
          %1977 = vmatprep.subr.bf16.mxu0 0
          %1978 = vmatpush1.bf16.msra.mxu0 0
          %1979 = vmatprep.subr.bf16.mxu0 0
          %1980 = vmatpush1.bf16.msra.mxu0 0
          %1981 = vmatprep.subr.bf16.mxu0 0
          %1982 = vmatpush1.bf16.msra.mxu0 0
          %1983 = vmatprep.subr.bf16.mxu0 0
          %1984 = vmatpush1.bf16.msra.mxu0 0
          %1985 = vmatprep.subr.bf16.mxu0 0
          %1986 = vmatpush1.bf16.msra.mxu0 0
          %1987 = vmatprep.subr.bf16.mxu0 0
          %1988 = vmatpush1.bf16.msra.mxu0 0
          %1989 = vmatprep.mubr.bf16.mxu0 0
          %1990 = vmatmul.mubr.bf16.gmra.mrb[0].mxu0 %v1955
          %v1991 = vpop.f32.mrb[0].mxu0
          %v1992 = vadd.f32 %v1940, %v1991
          %v1993 = vpop.f32.mrb[0].mxu0
          %v1994 = vpop.f32.mrb[0].mxu0
          %v1995 = vpop.f32.mrb[0].mxu0
          %1996 = vdwg.mxu0
          %v1997 = vtanh.pop %v1992
          %v1998 = vpack.c.bf16 %v1997, %v1997
          %v1999 = vld [vmem:[%s10] sm:$0xf]
          %v2000 = vld [vmem:[%s10 + $0x4] sm:$0xf]
          %v2001 = vld [vmem:[%s10 + $0x8] sm:$0xf]
          %v2002 = vld [vmem:[%s10 + $0xc] sm:$0xf]
          %v2003 = vld [vmem:[%s11] sm:$0x1]
          %v2005 = vlaneseq
          %v2006 = vshrl.u32 %v2005, 7
          %v2007 = vsub.s32 0, %v2006
          %v2008 = vrot.slane %v2003, %v2007
          %v2014 = vunpack.c.l.b16 %v1999
          %v2015 = vunpack.c.l.b16 %v2000
          %v2016 = vunpack.c.l.b16 %v2001
          %v2017 = vunpack.c.l.b16 %v2002
          %v2018 = vpack.c.b16 %v2015, %v2014
          %v2019 = vpack.c.b16 %v2017, %v2016
          %v2023 = vsel %vm604, %v1998, 0
          %2025 = vmatprep.subr.bf16.mxu0 0
          %2026 = vmatpush1.bf16.msra.mxu0 %v2018
          %2027 = vmatprep.subr.bf16.mxu0 0
          %2028 = vmatpush1.bf16.msra.mxu0 %v2019
          %2029 = vmatprep.subr.bf16.mxu0 0
          %2030 = vmatpush1.bf16.msra.mxu0 0
          %2031 = vmatprep.subr.bf16.mxu0 0
          %2032 = vmatpush1.bf16.msra.mxu0 0
          %2033 = vmatprep.subr.bf16.mxu0 0
          %2034 = vmatpush1.bf16.msra.mxu0 0
          %2035 = vmatprep.subr.bf16.mxu0 0
          %2036 = vmatpush1.bf16.msra.mxu0 0
          %2037 = vmatprep.subr.bf16.mxu0 0
          %2038 = vmatpush1.bf16.msra.mxu0 0
          %2039 = vmatprep.subr.bf16.mxu0 0
          %2040 = vmatpush1.bf16.msra.mxu0 0
          %2041 = vmatprep.subr.bf16.mxu0 0
          %2042 = vmatpush1.bf16.msra.mxu0 0
          %2043 = vmatprep.subr.bf16.mxu0 0
          %2044 = vmatpush1.bf16.msra.mxu0 0
          %2045 = vmatprep.subr.bf16.mxu0 0
          %2046 = vmatpush1.bf16.msra.mxu0 0
          %2047 = vmatprep.subr.bf16.mxu0 0
          %2048 = vmatpush1.bf16.msra.mxu0 0
          %2049 = vmatprep.subr.bf16.mxu0 0
          %2050 = vmatpush1.bf16.msra.mxu0 0
          %2051 = vmatprep.subr.bf16.mxu0 0
          %2052 = vmatpush1.bf16.msra.mxu0 0
          %2053 = vmatprep.subr.bf16.mxu0 0
          %2054 = vmatpush1.bf16.msra.mxu0 0
          %2055 = vmatprep.subr.bf16.mxu0 0
          %2056 = vmatpush1.bf16.msra.mxu0 0
          %2057 = vmatprep.mubr.bf16.mxu0 0
          %2058 = vmatmul.mubr.bf16.gmra.mrb[0].mxu0 %v2023
          %v2059 = vpop.f32.mrb[0].mxu0
          %v2060 = vadd.f32 %v2008, %v2059
          %v2061 = vpop.f32.mrb[0].mxu0
          %v2062 = vpop.f32.mrb[0].mxu0
          %v2063 = vpop.f32.mrb[0].mxu0
          %2064 = vdwg.mxu0
          %vm2065 = vcmask 58368
          %2066 = vst.msk [vmem:[#allocation3] sm:$0x3] %vm2065, %v2060
          %v2067 = vsel %vm2065, %v2060, -inf
          %2068 = vmax.xlane.f32.xlu0 %v2067
          %v2069 = vpop.xlane.xlu0 %2068
          %v2070 = vsub.f32 %v2060, %v2069
          %v2071 = vmul.f32 %v2070, 1.442695
          %v2072 = vpow.pop %v2071
          %v2073 = vsel %vm2065, %v2072, 0.0
          %2074 = vadd.xlane.f32.xlu0 %v2073
          %v2075 = vpop.xlane.xlu0 %2074
          %v2076 = vlog2.pop %v2075
          %v2077 = vmul.f32 %v2076, 0.6931472
          %v2078 = vadd.f32 %v2069, %v2077
          %v2079 = vld [vmem:[%s12] sm:$0x3]
          %v2080 = vmul.f32 %v2079, %v2060
          %v2081 = vsel %vm2065, %v2080, 0.0
          %2082 = vadd.xlane.f32.xlu0 %v2081
          %v2083 = vpop.xlane.xlu0 %2082
          %v2084 = vsub.f32 %v2078, %v2083
          %vm2085 = vcmask 1041408
          %v2086 = vsel %vm2085, %v2084, 0.0
          %v2087 = vrot.slane %v2086, 4
          %v2088 = vadd.f32 %v2086, %v2087
          %v2089 = vrot.slane %v2088, 2
          %v2090 = vadd.f32 %v2088, %v2089
          %v2091 = vrot.slane %v2090, 1
          %v2092 = vadd.f32 %v2090, %v2091
          %v2093 = vmul.f32 %v2092, 0.5
          %vm2094 = vcmask 0
          %2095 = vst.msk [vmem:[#allocation5] sm:$0x1] %vm2094, %v2093
        $region80: #{action_bert_forward.1} parent=71 // pred_fallthru
          _
        // Predicated region
        $region81: #{action_bert_forward.1} parent=71 // pred_check
          %p2096 = pneg %p339
        $region82: #{action_bert_forward.1} parent=71 // pred_check_branch
          %2098 = sbr.rel (%p2096) target = $region84
        $region83: #{action_bert_forward.1} parent=71 // pred_region
          %s2100 = ssub.s32 32, 32
          %2101 = vsyncadd [#allocation4], %s2100
          %s2103 = sshll.u32 [#allocation3], 4
          %s2104 = int_to_ptr.vmem [resolvable:$true] %s2103
          %2106 = dma.vmem_to_hbm [thread:$0]  %s2104, 32, %s13, [#allocation4]
        $region84: #{action_bert_forward.1} parent=71 // pred_fallthru
          _
        // Predicated region
        $region85: #{action_bert_forward.1} parent=71 // pred_check
          %p2107 = pneg %p360
        $region86: #{action_bert_forward.1} parent=71 // pred_check_branch
          %2109 = sbr.rel (%p2107) target = $region88
        $region87: #{action_bert_forward.1} parent=71 // pred_region
          %s2111 = ssub.s32 16, 16
          %2112 = vsyncadd [#allocation6], %s2111
          %s2114 = sshll.u32 [#allocation5], 4
          %s2115 = int_to_ptr.vmem [resolvable:$true] %s2114
          %2117 = dma.vmem_to_hbm [thread:$0]  %s2115, 16, %s14, [#allocation6]
        $region88: #{action_bert_forward.1} parent=71 // pred_fallthru
          _
        // Predicated region
        $region89: #{action_bert_forward.1} parent=71 // pred_check
          %p2118 = pneg %p339
        $region90: #{action_bert_forward.1} parent=71 // pred_check_branch
          %2120 = sbr.rel (%p2118) target = $region92
        $region91: #{action_bert_forward.1} parent=71 // pred_region
          %2121 = dma.done [#allocation4], 32
        $region92: #{action_bert_forward.1} parent=71 // pred_fallthru
          _
        // Predicated region
        $region93: #{action_bert_forward.1} parent=71 // pred_check
          %p2122 = pneg %p360
        $region94: #{action_bert_forward.1} parent=71 // pred_check_branch
          %2124 = sbr.rel (%p2122) target = $region96
        $region95: #{action_bert_forward.1} parent=71 // pred_region
          %2125 = dma.done [#allocation6], 16
        $region96: #{action_bert_forward.1} parent=71 // pred_fallthru
          _
      $region72: #{action_bert_forward.1} parent=5 // pred_fallthru
        _
      %p2126 = scmp.le.s32.totalorder 2, %s23
      // Predicated region
      $region97: #{action_bert_forward.1} parent=5 // pred_check
        %p2127 = pneg %p2126
      $region98: #{action_bert_forward.1} parent=5 // pred_check_branch
        %2129 = sbr.rel (%p2127) target = $region100
      $region99: #{action_bert_forward.1} parent=5 // pred_region
        %s2130 = ssub.s32 %s23, 2
      $region100: #{action_bert_forward.1} parent=5 // pred_fallthru
        _
    $region6: #{action_bert_forward.1} parent=1 // loop_footer
      %s27 = sadd.s32 1, %s23
    $region7: #{action_bert_forward.1} parent=1 // loop_footer_branch
      %22 = sbr.rel target = $region3
    $region8: #{action_bert_forward.1} parent=1 // loop_exit
      _
    %2131 = vsyncpa [#allocation4], 1
    %s2132 = scalar_lea.sflag [#allocation4], 1
    %2133 = vsyncpa %s2132, 1
    %2134 = vsyncpa [#allocation6], 1

</llo_original>
